<compile_context>
chip_gen: v5e
topology: v5e:2x2
jax: 0.10.0
libtpu: 0.0.40
codegen_flags: <defaults>
</compile_context>

<pallas_src>
import jax
import jax.numpy as jnp
from jax import lax
from jax.experimental import pallas as pl
from jax.experimental.pallas import tpu as pltpu


def _lstm_kernel(x_ref,      # (Bt, T)    input, I=1 squeezed
                 wih0_ref,   # (1, 4H)    layer-0 input weights^T (i/f/o cols pre-scaled 0.5)
                 b0_ref,     # (1, 4H)    layer-0 bias (b_ih + b_hh, pre-scaled)
                 whh0_ref,   # (H, 4H)    layer-0 recurrent weights^T (pre-scaled)
                 wih1_ref,   # (H, 4H)    layer-1 input weights^T (pre-scaled)
                 whh1_ref,   # (H, 4H)    layer-1 recurrent weights^T (pre-scaled)
                 b1_ref,     # (1, 4H)    layer-1 bias (pre-scaled)
                 fcw_ref,    # (H, 128)   final linear weights^T, zero-padded to 128 lanes
                 fcb_ref,    # (1, 128)   final linear bias, zero-padded
                 o_ref):     # (Bt, 128)  lane-dense output slab
    Bt, T = x_ref.shape
    H = whh0_ref.shape[0]
    G = 4 * H

    x = x_ref[...]
    wih0 = wih0_ref[...]
    b0 = b0_ref[...]
    whh0 = whh0_ref[...]
    wih1 = wih1_ref[...]
    whh1 = whh1_ref[...]
    b1 = b1_ref[...]

    # Per-lane constants for the single-tanh gate trick (PyTorch gate order [i, f, g, o]).
    # The i/f/o columns of the weights were pre-scaled by 0.5 in the wrapper, so here:
    #   sigmoid(z) = 0.5 * tanh(z') + 0.5   where z' (the matmul result) already equals 0.5*z
    #   tanh(z)    = tanh(z')               (g lanes unscaled)
    lane = lax.broadcasted_iota(jnp.int32, (1, G), 1)
    is_g = jnp.logical_and(lane >= 2 * H, lane < 3 * H)
    post_scale = jnp.where(is_g, 1.0, 0.5).astype(jnp.float32)
    post_bias = jnp.where(is_g, 0.0, 0.5).astype(jnp.float32)

    def gate_act(z):                      # (Bt, 4H) pre-activations -> activations
        return jnp.tanh(z) * post_scale + post_bias   # one full-vreg EUP pass + VPU affine

    zB = jnp.zeros((Bt, H), jnp.float32)
    h0, c0, h1, c1 = zB, zB, zB, zB

    # --- Recurrence: statically unrolled (T small & static); 3 small matmuls + 2 tanh/step ---
    for t in range(T):
        # layer 0: rank-1 input projection (off the h chain, pure VPU, recomputed per step)
        #          + one (Bt,H)@(H,4H) matmul on the serial path
        g0 = (x[:, t:t + 1] * wih0 + b0
              + jnp.dot(h0, whh0, preferred_element_type=jnp.float32))
        a0 = gate_act(g0)
        i0, f0 = a0[:, 0:H], a0[:, H:2 * H]
        gg0, o0 = a0[:, 2 * H:3 * H], a0[:, 3 * H:4 * H]
        c0 = f0 * c0 + i0 * gg0
        h0 = o0 * jnp.tanh(c0)

        # layer 1: split matmuls — dot(h1_prev, whh1) depends only on the previous step's h1,
        # so it can overlap layer-0's matmul/gate math; no per-step lane concatenate.
        g1 = (jnp.dot(h1, whh1, preferred_element_type=jnp.float32) + b1
              + jnp.dot(h0, wih1, preferred_element_type=jnp.float32))
        a1 = gate_act(g1)
        i1, f1 = a1[:, 0:H], a1[:, H:2 * H]
        gg1, o1 = a1[:, 2 * H:3 * H], a1[:, 3 * H:4 * H]
        c1 = f1 * c1 + i1 * gg1
        h1 = o1 * jnp.tanh(c1)

    # Epilogue: lane-dense final linear on the last hidden state of the top layer
    # (== out[:, -1, :] @ fc, with fc zero-padded to 128 output columns).
    o_ref[...] = (jnp.dot(h1, fcw_ref[...], preferred_element_type=jnp.float32)
                  + fcb_ref[...])


def _prescale_gate_cols(w, H):
    """Fold the 0.5 sigmoid-via-tanh pre-scale into the i/f/o gate columns (g untouched)."""
    col = jnp.arange(4 * H)
    is_g = jnp.logical_and(col >= 2 * H, col < 3 * H)
    scale = jnp.where(is_g, 1.0, 0.5).astype(w.dtype)
    return w * scale[None, :]


def _pick_tiling(B):
    """Return (B_pad, bt): prefer >=2 sublane-aligned batch tiles (v7x has 2 TensorCores)."""
    if B <= 8:
        return B, B                       # tiny batch: single full block (always legal)
    for bt in (1024, 512, 256, 128, 64, 32, 16, 8):
        if B % bt == 0 and B // bt >= 2:
            return B, bt
    bt = min(256, max(8, pl.next_power_of_2(B) // 2))
    return ((B + bt - 1) // bt) * bt, bt  # pad B instead of a misaligned last tile


def tabular_lstm_forward(x, params):
    """x: (B, T, I=1) batch-first, like the PyTorch module. Returns (B, num_classes)."""
    B, T, I = x.shape
    assert I == 1, "TabularLSTM uses input_size=1"
    H = params["whh0"].shape[0]
    C = params["fcw"].shape[1]
    LANES = 128

    # Squeeze I=1 and keep batch-first: no host-side transpose needed.
    x2 = jnp.reshape(x, (B, T)).astype(jnp.float32)

    # One-time weight prep (wrapper-side, outside the kernel):
    #   * fold the sigmoid-via-tanh 0.5 pre-scale into the i/f/o gate columns
    #   * pad the final Linear to a lane-dense 128-wide output slab
    wih0 = _prescale_gate_cols(params["wih0"], H)
    b0 = _prescale_gate_cols(params["b0"], H)
    whh0 = _prescale_gate_cols(params["whh0"], H)
    wih1 = _prescale_gate_cols(params["wih1"], H)
    whh1 = _prescale_gate_cols(params["whh1"], H)
    b1 = _prescale_gate_cols(params["b1"], H)
    fcw = jnp.zeros((H, LANES), jnp.float32).at[:, :C].set(params["fcw"])
    fcb = jnp.zeros((1, LANES), jnp.float32).at[:, :C].set(params["fcb"])

    B_pad, bt = _pick_tiling(B)
    if B_pad != B:
        x2 = jnp.pad(x2, ((0, B_pad - B), (0, 0)))
    grid = (B_pad // bt,)

    def resident(a):  # weights: same block every grid step -> stays resident in VMEM
        return pl.BlockSpec(a.shape, lambda i: (0, 0))

    in_specs = [
        pl.BlockSpec((bt, T), lambda i: (i, 0)),   # x tile per grid step
        resident(wih0), resident(b0), resident(whh0),
        resident(wih1), resident(whh1), resident(b1),
        resident(fcw), resident(fcb),
    ]
    out_spec = pl.BlockSpec((bt, LANES), lambda i: (i, 0))

    # Advisory cost estimate so XLA schedules neighbors around this latency-bound kernel.
    flops = 2 * B_pad * T * (H * 4 * H + 2 * H * 4 * H) + 2 * B_pad * H * LANES
    transcendentals = B_pad * T * 2 * (4 * H + H)   # one full-width tanh + tanh(c) per cell
    nparam = (wih0.size + b0.size + whh0.size + wih1.size + whh1.size + b1.size
              + fcw.size + fcb.size)
    bytes_accessed = 4 * (x2.size + nparam + B_pad * LANES)

    out = pl.pallas_call(
        _lstm_kernel,
        out_shape=jax.ShapeDtypeStruct((B_pad, LANES), jnp.float32),
        grid=grid,
        in_specs=in_specs,
        out_specs=out_spec,
        compiler_params=pltpu.CompilerParams(dimension_semantics=("parallel",)),
        cost_estimate=pl.CostEstimate(flops=flops,
                                      transcendentals=transcendentals,
                                      bytes_accessed=bytes_accessed),
    )(x2, wih0, b0, whh0, wih1, whh1, b1, fcw, fcb)

    return out[:B, :C]


def init_params(key, input_size=1, hidden_size=32, num_classes=2):
    """Deterministic uniform(-k, k) init, k = 1/sqrt(hidden_size) (PyTorch-style)."""
    k = 1.0 / jnp.sqrt(jnp.float32(hidden_size))
    keys = jax.random.split(key, 10)

    def u(kk, shape):
        return jax.random.uniform(kk, shape, jnp.float32, -k, k)

    H = hidden_size
    return {
        # stored transposed: x @ W_ih^T  ==  x @ wih
        "wih0": u(keys[0], (input_size, 4 * H)),
        "whh0": u(keys[1], (H, 4 * H)),
        "b0": u(keys[2], (1, 4 * H)) + u(keys[3], (1, 4 * H)),   # b_ih + b_hh folded
        "wih1": u(keys[4], (H, 4 * H)),
        "whh1": u(keys[5], (H, 4 * H)),
        "b1": u(keys[6], (1, 4 * H)) + u(keys[7], (1, 4 * H)),
        "fcw": u(keys[8], (H, num_classes)),
        "fcb": u(keys[9], (1, num_classes)),
    }


def _reference_forward(x, params):
    """Pure-JAX reference of the same forward pass (for correctness check)."""
    B, T, I = x.shape
    H = params["whh0"].shape[0]

    def cell(gates, c):
        i = jax.nn.sigmoid(gates[:, 0 * H:1 * H])
        f = jax.nn.sigmoid(gates[:, 1 * H:2 * H])
        g = jnp.tanh(gates[:, 2 * H:3 * H])
        o = jax.nn.sigmoid(gates[:, 3 * H:4 * H])
        c_new = f * c + i * g
        h_new = o * jnp.tanh(c_new)
        return h_new, c_new

    h0 = c0 = h1 = c1 = jnp.zeros((B, H), jnp.float32)
    for t in range(T):
        xt = x[:, t, :]                                    # (B, 1)
        # input_size == 1 -> xt @ W_ih0^T is exactly a rank-1 broadcast.
        g0 = xt * params["wih0"] + h0 @ params["whh0"] + params["b0"]
        h0, c0 = cell(g0, c0)
        g1 = h0 @ params["wih1"] + h1 @ params["whh1"] + params["b1"]
        h1, c1 = cell(g1, c1)
    return h1 @ params["fcw"] + params["fcb"]


if __name__ == "__main__":
    key = jax.random.PRNGKey(0)
    kx, kp = jax.random.split(key)

    B, T, I = 4, 8, 1          # batch, sequence length, input_size (tabular -> 1 feature/step)
    H, C = 32, 2               # hidden_size, num_classes

    x = jax.random.normal(kx, (B, T, I), jnp.float32)
    params = init_params(kp, input_size=I, hidden_size=H, num_classes=C)

    out = tabular_lstm_forward(x, params)
    out = jax.block_until_ready(out)

    ref = _reference_forward(x, params)
    assert out.shape == (B, C)
    # Tolerance accounts for (a) the tanh-form sigmoid, (b) split-matmul accumulation order,
    # and (c) bf16-pass rounding differences between MXU (kernel) and XLA (reference) f32
    # matmuls at DEFAULT precision; real bugs (gate order / bias / scaling) are >> 1e-2.
    assert jnp.allclose(out, ref, atol=1e-2, rtol=1e-2), "Pallas output mismatch vs reference"

    print("KERNEL_OK")
</pallas_src>

<mosaic_0001>
module attributes {stable_mosaic.version = 11 : i64} {
  func.func @_lstm_kernel(%arg0: i32, %arg1: memref<4x8xf32, #tpu.memory_space<vmem>>, %arg2: memref<1x128xf32, #tpu.memory_space<vmem>>, %arg3: memref<1x128xf32, #tpu.memory_space<vmem>>, %arg4: memref<32x128xf32, #tpu.memory_space<vmem>>, %arg5: memref<32x128xf32, #tpu.memory_space<vmem>>, %arg6: memref<32x128xf32, #tpu.memory_space<vmem>>, %arg7: memref<1x128xf32, #tpu.memory_space<vmem>>, %arg8: memref<32x128xf32, #tpu.memory_space<vmem>>, %arg9: memref<1x128xf32, #tpu.memory_space<vmem>>, %arg10: memref<4x128xf32, #tpu.memory_space<vmem>>) attributes {dimension_semantics = [#tpu.dimension_semantics<parallel>], iteration_bounds = array<i64: 1>, scalar_prefetch = 0 : i64, scratch_operands = 0 : i64, tpu.core_type = #tpu.core_type<tc>, window_params = [{transform_indices = @transform_0, window_bounds = array<i64: 4, 8>}, {pipeline_mode = #tpu.pipeline_mode<synchronous>, transform_indices = @transform_1, window_bounds = array<i64: 1, 128>}, {pipeline_mode = #tpu.pipeline_mode<synchronous>, transform_indices = @transform_2, window_bounds = array<i64: 1, 128>}, {pipeline_mode = #tpu.pipeline_mode<synchronous>, transform_indices = @transform_3, window_bounds = array<i64: 32, 128>}, {pipeline_mode = #tpu.pipeline_mode<synchronous>, transform_indices = @transform_4, window_bounds = array<i64: 32, 128>}, {pipeline_mode = #tpu.pipeline_mode<synchronous>, transform_indices = @transform_5, window_bounds = array<i64: 32, 128>}, {pipeline_mode = #tpu.pipeline_mode<synchronous>, transform_indices = @transform_6, window_bounds = array<i64: 1, 128>}, {pipeline_mode = #tpu.pipeline_mode<synchronous>, transform_indices = @transform_7, window_bounds = array<i64: 32, 128>}, {pipeline_mode = #tpu.pipeline_mode<synchronous>, transform_indices = @transform_8, window_bounds = array<i64: 1, 128>}, {transform_indices = @transform_9, window_bounds = array<i64: 4, 128>}]} {
    %c0 = arith.constant 0 : index
    %c0_0 = arith.constant 0 : index
    %0 = vector.load %arg1[%c0, %c0_0] : memref<4x8xf32, #tpu.memory_space<vmem>>, vector<4x8xf32>
    %c0_1 = arith.constant 0 : index
    %c0_2 = arith.constant 0 : index
    %1 = vector.load %arg2[%c0_1, %c0_2] : memref<1x128xf32, #tpu.memory_space<vmem>>, vector<1x128xf32>
    %c0_3 = arith.constant 0 : index
    %c0_4 = arith.constant 0 : index
    %2 = vector.load %arg3[%c0_3, %c0_4] : memref<1x128xf32, #tpu.memory_space<vmem>>, vector<1x128xf32>
    %c0_5 = arith.constant 0 : index
    %c0_6 = arith.constant 0 : index
    %3 = vector.load %arg4[%c0_5, %c0_6] : memref<32x128xf32, #tpu.memory_space<vmem>>, vector<32x128xf32>
    %c0_7 = arith.constant 0 : index
    %c0_8 = arith.constant 0 : index
    %4 = vector.load %arg5[%c0_7, %c0_8] : memref<32x128xf32, #tpu.memory_space<vmem>>, vector<32x128xf32>
    %c0_9 = arith.constant 0 : index
    %c0_10 = arith.constant 0 : index
    %5 = vector.load %arg6[%c0_9, %c0_10] : memref<32x128xf32, #tpu.memory_space<vmem>>, vector<32x128xf32>
    %c0_11 = arith.constant 0 : index
    %c0_12 = arith.constant 0 : index
    %6 = vector.load %arg7[%c0_11, %c0_12] : memref<1x128xf32, #tpu.memory_space<vmem>>, vector<1x128xf32>
    %7 = tpu.iota {dimensions = array<i32: 1>} : vector<1x128xi32>
    %c64_i32 = arith.constant 64 : i32
    %8 = vector.broadcast %c64_i32 : i32 to vector<1x128xi32>
    %9 = arith.cmpi sge, %7, %8 : vector<1x128xi32>
    %c96_i32 = arith.constant 96 : i32
    %10 = vector.broadcast %c96_i32 : i32 to vector<1x128xi32>
    %11 = arith.cmpi slt, %7, %10 : vector<1x128xi32>
    %12 = arith.andi %9, %11 : vector<1x128xi1>
    %cst = arith.constant 1.000000e+00 : f32
    %cst_13 = arith.constant 5.000000e-01 : f32
    %13 = vector.broadcast %cst : f32 to vector<1x128xf32>
    %14 = vector.broadcast %cst_13 : f32 to vector<1x128xf32>
    %15 = arith.select %12, %13, %14 : vector<1x128xi1>, vector<1x128xf32>
    %cst_14 = arith.constant 0.000000e+00 : f32
    %cst_15 = arith.constant 5.000000e-01 : f32
    %16 = vector.broadcast %cst_14 : f32 to vector<1x128xf32>
    %17 = vector.broadcast %cst_15 : f32 to vector<1x128xf32>
    %18 = arith.select %12, %16, %17 : vector<1x128xi1>, vector<1x128xf32>
    %cst_16 = arith.constant 0.000000e+00 : f32
    %19 = vector.broadcast %cst_16 : f32 to vector<4x32xf32>
    %20 = vector.extract_strided_slice %0 {offsets = [0, 0], sizes = [4, 1], strides = [1, 1]} : vector<4x8xf32> to vector<4x1xf32>
    %21 = vector.broadcast %20 : vector<4x1xf32> to vector<4x128xf32>
    %22 = vector.broadcast %1 : vector<1x128xf32> to vector<4x128xf32>
    %23 = arith.mulf %21, %22 : vector<4x128xf32>
    %24 = vector.broadcast %2 : vector<1x128xf32> to vector<4x128xf32>
    %25 = arith.addf %23, %24 : vector<4x128xf32>
    %cst_17 = arith.constant dense<0.000000e+00> : vector<4x128xf32>
    %26 = tpu.matmul %19, %3, %cst_17 {dimension_numbers = #tpu.dot_dimension_numbers<[1], [0], [0], [1], [0, 0, 1, 1], [], []>} : vector<4x32xf32>, vector<32x128xf32>, vector<4x128xf32> -> vector<4x128xf32>
    %27 = arith.addf %25, %26 : vector<4x128xf32>
    %28 = math.tanh %27 : vector<4x128xf32>
    %29 = vector.broadcast %15 : vector<1x128xf32> to vector<4x128xf32>
    %30 = arith.mulf %28, %29 : vector<4x128xf32>
    %31 = vector.broadcast %18 : vector<1x128xf32> to vector<4x128xf32>
    %32 = arith.addf %30, %31 : vector<4x128xf32>
    %33 = vector.extract_strided_slice %32 {offsets = [0, 0], sizes = [4, 32], strides = [1, 1]} : vector<4x128xf32> to vector<4x32xf32>
    %34 = vector.extract_strided_slice %32 {offsets = [0, 32], sizes = [4, 32], strides = [1, 1]} : vector<4x128xf32> to vector<4x32xf32>
    %35 = vector.extract_strided_slice %32 {offsets = [0, 64], sizes = [4, 32], strides = [1, 1]} : vector<4x128xf32> to vector<4x32xf32>
    %36 = vector.extract_strided_slice %32 {offsets = [0, 96], sizes = [4, 32], strides = [1, 1]} : vector<4x128xf32> to vector<4x32xf32>
    %37 = arith.mulf %34, %19 : vector<4x32xf32>
    %38 = arith.mulf %33, %35 : vector<4x32xf32>
    %39 = arith.addf %37, %38 : vector<4x32xf32>
    %40 = math.tanh %39 : vector<4x32xf32>
    %41 = arith.mulf %36, %40 : vector<4x32xf32>
    %cst_18 = arith.constant dense<0.000000e+00> : vector<4x128xf32>
    %42 = tpu.matmul %19, %5, %cst_18 {dimension_numbers = #tpu.dot_dimension_numbers<[1], [0], [0], [1], [0, 0, 1, 1], [], []>} : vector<4x32xf32>, vector<32x128xf32>, vector<4x128xf32> -> vector<4x128xf32>
    %43 = vector.broadcast %6 : vector<1x128xf32> to vector<4x128xf32>
    %44 = arith.addf %42, %43 : vector<4x128xf32>
    %cst_19 = arith.constant dense<0.000000e+00> : vector<4x128xf32>
    %45 = tpu.matmul %41, %4, %cst_19 {dimension_numbers = #tpu.dot_dimension_numbers<[1], [0], [0], [1], [0, 0, 1, 1], [], []>} : vector<4x32xf32>, vector<32x128xf32>, vector<4x128xf32> -> vector<4x128xf32>
    %46 = arith.addf %44, %45 : vector<4x128xf32>
    %47 = math.tanh %46 : vector<4x128xf32>
    %48 = vector.broadcast %15 : vector<1x128xf32> to vector<4x128xf32>
    %49 = arith.mulf %47, %48 : vector<4x128xf32>
    %50 = vector.broadcast %18 : vector<1x128xf32> to vector<4x128xf32>
    %51 = arith.addf %49, %50 : vector<4x128xf32>
    %52 = vector.extract_strided_slice %51 {offsets = [0, 0], sizes = [4, 32], strides = [1, 1]} : vector<4x128xf32> to vector<4x32xf32>
    %53 = vector.extract_strided_slice %51 {offsets = [0, 32], sizes = [4, 32], strides = [1, 1]} : vector<4x128xf32> to vector<4x32xf32>
    %54 = vector.extract_strided_slice %51 {offsets = [0, 64], sizes = [4, 32], strides = [1, 1]} : vector<4x128xf32> to vector<4x32xf32>
    %55 = vector.extract_strided_slice %51 {offsets = [0, 96], sizes = [4, 32], strides = [1, 1]} : vector<4x128xf32> to vector<4x32xf32>
    %56 = arith.mulf %53, %19 : vector<4x32xf32>
    %57 = arith.mulf %52, %54 : vector<4x32xf32>
    %58 = arith.addf %56, %57 : vector<4x32xf32>
    %59 = math.tanh %58 : vector<4x32xf32>
    %60 = arith.mulf %55, %59 : vector<4x32xf32>
    %61 = vector.extract_strided_slice %0 {offsets = [0, 1], sizes = [4, 1], strides = [1, 1]} : vector<4x8xf32> to vector<4x1xf32>
    %62 = vector.broadcast %61 : vector<4x1xf32> to vector<4x128xf32>
    %63 = vector.broadcast %1 : vector<1x128xf32> to vector<4x128xf32>
    %64 = arith.mulf %62, %63 : vector<4x128xf32>
    %65 = vector.broadcast %2 : vector<1x128xf32> to vector<4x128xf32>
    %66 = arith.addf %64, %65 : vector<4x128xf32>
    %cst_20 = arith.constant dense<0.000000e+00> : vector<4x128xf32>
    %67 = tpu.matmul %41, %3, %cst_20 {dimension_numbers = #tpu.dot_dimension_numbers<[1], [0], [0], [1], [0, 0, 1, 1], [], []>} : vector<4x32xf32>, vector<32x128xf32>, vector<4x128xf32> -> vector<4x128xf32>
    %68 = arith.addf %66, %67 : vector<4x128xf32>
    %69 = math.tanh %68 : vector<4x128xf32>
    %70 = vector.broadcast %15 : vector<1x128xf32> to vector<4x128xf32>
    %71 = arith.mulf %69, %70 : vector<4x128xf32>
    %72 = vector.broadcast %18 : vector<1x128xf32> to vector<4x128xf32>
    %73 = arith.addf %71, %72 : vector<4x128xf32>
    %74 = vector.extract_strided_slice %73 {offsets = [0, 0], sizes = [4, 32], strides = [1, 1]} : vector<4x128xf32> to vector<4x32xf32>
    %75 = vector.extract_strided_slice %73 {offsets = [0, 32], sizes = [4, 32], strides = [1, 1]} : vector<4x128xf32> to vector<4x32xf32>
    %76 = vector.extract_strided_slice %73 {offsets = [0, 64], sizes = [4, 32], strides = [1, 1]} : vector<4x128xf32> to vector<4x32xf32>
    %77 = vector.extract_strided_slice %73 {offsets = [0, 96], sizes = [4, 32], strides = [1, 1]} : vector<4x128xf32> to vector<4x32xf32>
    %78 = arith.mulf %75, %39 : vector<4x32xf32>
    %79 = arith.mulf %74, %76 : vector<4x32xf32>
    %80 = arith.addf %78, %79 : vector<4x32xf32>
    %81 = math.tanh %80 : vector<4x32xf32>
    %82 = arith.mulf %77, %81 : vector<4x32xf32>
    %cst_21 = arith.constant dense<0.000000e+00> : vector<4x128xf32>
    %83 = tpu.matmul %60, %5, %cst_21 {dimension_numbers = #tpu.dot_dimension_numbers<[1], [0], [0], [1], [0, 0, 1, 1], [], []>} : vector<4x32xf32>, vector<32x128xf32>, vector<4x128xf32> -> vector<4x128xf32>
    %84 = vector.broadcast %6 : vector<1x128xf32> to vector<4x128xf32>
    %85 = arith.addf %83, %84 : vector<4x128xf32>
    %cst_22 = arith.constant dense<0.000000e+00> : vector<4x128xf32>
    %86 = tpu.matmul %82, %4, %cst_22 {dimension_numbers = #tpu.dot_dimension_numbers<[1], [0], [0], [1], [0, 0, 1, 1], [], []>} : vector<4x32xf32>, vector<32x128xf32>, vector<4x128xf32> -> vector<4x128xf32>
    %87 = arith.addf %85, %86 : vector<4x128xf32>
    %88 = math.tanh %87 : vector<4x128xf32>
    %89 = vector.broadcast %15 : vector<1x128xf32> to vector<4x128xf32>
    %90 = arith.mulf %88, %89 : vector<4x128xf32>
    %91 = vector.broadcast %18 : vector<1x128xf32> to vector<4x128xf32>
    %92 = arith.addf %90, %91 : vector<4x128xf32>
    %93 = vector.extract_strided_slice %92 {offsets = [0, 0], sizes = [4, 32], strides = [1, 1]} : vector<4x128xf32> to vector<4x32xf32>
    %94 = vector.extract_strided_slice %92 {offsets = [0, 32], sizes = [4, 32], strides = [1, 1]} : vector<4x128xf32> to vector<4x32xf32>
    %95 = vector.extract_strided_slice %92 {offsets = [0, 64], sizes = [4, 32], strides = [1, 1]} : vector<4x128xf32> to vector<4x32xf32>
    %96 = vector.extract_strided_slice %92 {offsets = [0, 96], sizes = [4, 32], strides = [1, 1]} : vector<4x128xf32> to vector<4x32xf32>
    %97 = arith.mulf %94, %58 : vector<4x32xf32>
    %98 = arith.mulf %93, %95 : vector<4x32xf32>
    %99 = arith.addf %97, %98 : vector<4x32xf32>
    %100 = math.tanh %99 : vector<4x32xf32>
    %101 = arith.mulf %96, %100 : vector<4x32xf32>
    %102 = vector.extract_strided_slice %0 {offsets = [0, 2], sizes = [4, 1], strides = [1, 1]} : vector<4x8xf32> to vector<4x1xf32>
    %103 = vector.broadcast %102 : vector<4x1xf32> to vector<4x128xf32>
    %104 = vector.broadcast %1 : vector<1x128xf32> to vector<4x128xf32>
    %105 = arith.mulf %103, %104 : vector<4x128xf32>
    %106 = vector.broadcast %2 : vector<1x128xf32> to vector<4x128xf32>
    %107 = arith.addf %105, %106 : vector<4x128xf32>
    %cst_23 = arith.constant dense<0.000000e+00> : vector<4x128xf32>
    %108 = tpu.matmul %82, %3, %cst_23 {dimension_numbers = #tpu.dot_dimension_numbers<[1], [0], [0], [1], [0, 0, 1, 1], [], []>} : vector<4x32xf32>, vector<32x128xf32>, vector<4x128xf32> -> vector<4x128xf32>
    %109 = arith.addf %107, %108 : vector<4x128xf32>
    %110 = math.tanh %109 : vector<4x128xf32>
    %111 = vector.broadcast %15 : vector<1x128xf32> to vector<4x128xf32>
    %112 = arith.mulf %110, %111 : vector<4x128xf32>
    %113 = vector.broadcast %18 : vector<1x128xf32> to vector<4x128xf32>
    %114 = arith.addf %112, %113 : vector<4x128xf32>
    %115 = vector.extract_strided_slice %114 {offsets = [0, 0], sizes = [4, 32], strides = [1, 1]} : vector<4x128xf32> to vector<4x32xf32>
    %116 = vector.extract_strided_slice %114 {offsets = [0, 32], sizes = [4, 32], strides = [1, 1]} : vector<4x128xf32> to vector<4x32xf32>
    %117 = vector.extract_strided_slice %114 {offsets = [0, 64], sizes = [4, 32], strides = [1, 1]} : vector<4x128xf32> to vector<4x32xf32>
    %118 = vector.extract_strided_slice %114 {offsets = [0, 96], sizes = [4, 32], strides = [1, 1]} : vector<4x128xf32> to vector<4x32xf32>
    %119 = arith.mulf %116, %80 : vector<4x32xf32>
    %120 = arith.mulf %115, %117 : vector<4x32xf32>
    %121 = arith.addf %119, %120 : vector<4x32xf32>
    %122 = math.tanh %121 : vector<4x32xf32>
    %123 = arith.mulf %118, %122 : vector<4x32xf32>
    %cst_24 = arith.constant dense<0.000000e+00> : vector<4x128xf32>
    %124 = tpu.matmul %101, %5, %cst_24 {dimension_numbers = #tpu.dot_dimension_numbers<[1], [0], [0], [1], [0, 0, 1, 1], [], []>} : vector<4x32xf32>, vector<32x128xf32>, vector<4x128xf32> -> vector<4x128xf32>
    %125 = vector.broadcast %6 : vector<1x128xf32> to vector<4x128xf32>
    %126 = arith.addf %124, %125 : vector<4x128xf32>
    %cst_25 = arith.constant dense<0.000000e+00> : vector<4x128xf32>
    %127 = tpu.matmul %123, %4, %cst_25 {dimension_numbers = #tpu.dot_dimension_numbers<[1], [0], [0], [1], [0, 0, 1, 1], [], []>} : vector<4x32xf32>, vector<32x128xf32>, vector<4x128xf32> -> vector<4x128xf32>
    %128 = arith.addf %126, %127 : vector<4x128xf32>
    %129 = math.tanh %128 : vector<4x128xf32>
    %130 = vector.broadcast %15 : vector<1x128xf32> to vector<4x128xf32>
    %131 = arith.mulf %129, %130 : vector<4x128xf32>
    %132 = vector.broadcast %18 : vector<1x128xf32> to vector<4x128xf32>
    %133 = arith.addf %131, %132 : vector<4x128xf32>
    %134 = vector.extract_strided_slice %133 {offsets = [0, 0], sizes = [4, 32], strides = [1, 1]} : vector<4x128xf32> to vector<4x32xf32>
    %135 = vector.extract_strided_slice %133 {offsets = [0, 32], sizes = [4, 32], strides = [1, 1]} : vector<4x128xf32> to vector<4x32xf32>
    %136 = vector.extract_strided_slice %133 {offsets = [0, 64], sizes = [4, 32], strides = [1, 1]} : vector<4x128xf32> to vector<4x32xf32>
    %137 = vector.extract_strided_slice %133 {offsets = [0, 96], sizes = [4, 32], strides = [1, 1]} : vector<4x128xf32> to vector<4x32xf32>
    %138 = arith.mulf %135, %99 : vector<4x32xf32>
    %139 = arith.mulf %134, %136 : vector<4x32xf32>
    %140 = arith.addf %138, %139 : vector<4x32xf32>
    %141 = math.tanh %140 : vector<4x32xf32>
    %142 = arith.mulf %137, %141 : vector<4x32xf32>
    %143 = vector.extract_strided_slice %0 {offsets = [0, 3], sizes = [4, 1], strides = [1, 1]} : vector<4x8xf32> to vector<4x1xf32>
    %144 = vector.broadcast %143 : vector<4x1xf32> to vector<4x128xf32>
    %145 = vector.broadcast %1 : vector<1x128xf32> to vector<4x128xf32>
    %146 = arith.mulf %144, %145 : vector<4x128xf32>
    %147 = vector.broadcast %2 : vector<1x128xf32> to vector<4x128xf32>
    %148 = arith.addf %146, %147 : vector<4x128xf32>
    %cst_26 = arith.constant dense<0.000000e+00> : vector<4x128xf32>
    %149 = tpu.matmul %123, %3, %cst_26 {dimension_numbers = #tpu.dot_dimension_numbers<[1], [0], [0], [1], [0, 0, 1, 1], [], []>} : vector<4x32xf32>, vector<32x128xf32>, vector<4x128xf32> -> vector<4x128xf32>
    %150 = arith.addf %148, %149 : vector<4x128xf32>
    %151 = math.tanh %150 : vector<4x128xf32>
    %152 = vector.broadcast %15 : vector<1x128xf32> to vector<4x128xf32>
    %153 = arith.mulf %151, %152 : vector<4x128xf32>
    %154 = vector.broadcast %18 : vector<1x128xf32> to vector<4x128xf32>
    %155 = arith.addf %153, %154 : vector<4x128xf32>
    %156 = vector.extract_strided_slice %155 {offsets = [0, 0], sizes = [4, 32], strides = [1, 1]} : vector<4x128xf32> to vector<4x32xf32>
    %157 = vector.extract_strided_slice %155 {offsets = [0, 32], sizes = [4, 32], strides = [1, 1]} : vector<4x128xf32> to vector<4x32xf32>
    %158 = vector.extract_strided_slice %155 {offsets = [0, 64], sizes = [4, 32], strides = [1, 1]} : vector<4x128xf32> to vector<4x32xf32>
    %159 = vector.extract_strided_slice %155 {offsets = [0, 96], sizes = [4, 32], strides = [1, 1]} : vector<4x128xf32> to vector<4x32xf32>
    %160 = arith.mulf %157, %121 : vector<4x32xf32>
    %161 = arith.mulf %156, %158 : vector<4x32xf32>
    %162 = arith.addf %160, %161 : vector<4x32xf32>
    %163 = math.tanh %162 : vector<4x32xf32>
    %164 = arith.mulf %159, %163 : vector<4x32xf32>
    %cst_27 = arith.constant dense<0.000000e+00> : vector<4x128xf32>
    %165 = tpu.matmul %142, %5, %cst_27 {dimension_numbers = #tpu.dot_dimension_numbers<[1], [0], [0], [1], [0, 0, 1, 1], [], []>} : vector<4x32xf32>, vector<32x128xf32>, vector<4x128xf32> -> vector<4x128xf32>
    %166 = vector.broadcast %6 : vector<1x128xf32> to vector<4x128xf32>
    %167 = arith.addf %165, %166 : vector<4x128xf32>
    %cst_28 = arith.constant dense<0.000000e+00> : vector<4x128xf32>
    %168 = tpu.matmul %164, %4, %cst_28 {dimension_numbers = #tpu.dot_dimension_numbers<[1], [0], [0], [1], [0, 0, 1, 1], [], []>} : vector<4x32xf32>, vector<32x128xf32>, vector<4x128xf32> -> vector<4x128xf32>
    %169 = arith.addf %167, %168 : vector<4x128xf32>
    %170 = math.tanh %169 : vector<4x128xf32>
    %171 = vector.broadcast %15 : vector<1x128xf32> to vector<4x128xf32>
    %172 = arith.mulf %170, %171 : vector<4x128xf32>
    %173 = vector.broadcast %18 : vector<1x128xf32> to vector<4x128xf32>
    %174 = arith.addf %172, %173 : vector<4x128xf32>
    %175 = vector.extract_strided_slice %174 {offsets = [0, 0], sizes = [4, 32], strides = [1, 1]} : vector<4x128xf32> to vector<4x32xf32>
    %176 = vector.extract_strided_slice %174 {offsets = [0, 32], sizes = [4, 32], strides = [1, 1]} : vector<4x128xf32> to vector<4x32xf32>
    %177 = vector.extract_strided_slice %174 {offsets = [0, 64], sizes = [4, 32], strides = [1, 1]} : vector<4x128xf32> to vector<4x32xf32>
    %178 = vector.extract_strided_slice %174 {offsets = [0, 96], sizes = [4, 32], strides = [1, 1]} : vector<4x128xf32> to vector<4x32xf32>
    %179 = arith.mulf %176, %140 : vector<4x32xf32>
    %180 = arith.mulf %175, %177 : vector<4x32xf32>
    %181 = arith.addf %179, %180 : vector<4x32xf32>
    %182 = math.tanh %181 : vector<4x32xf32>
    %183 = arith.mulf %178, %182 : vector<4x32xf32>
    %184 = vector.extract_strided_slice %0 {offsets = [0, 4], sizes = [4, 1], strides = [1, 1]} : vector<4x8xf32> to vector<4x1xf32>
    %185 = vector.broadcast %184 : vector<4x1xf32> to vector<4x128xf32>
    %186 = vector.broadcast %1 : vector<1x128xf32> to vector<4x128xf32>
    %187 = arith.mulf %185, %186 : vector<4x128xf32>
    %188 = vector.broadcast %2 : vector<1x128xf32> to vector<4x128xf32>
    %189 = arith.addf %187, %188 : vector<4x128xf32>
    %cst_29 = arith.constant dense<0.000000e+00> : vector<4x128xf32>
    %190 = tpu.matmul %164, %3, %cst_29 {dimension_numbers = #tpu.dot_dimension_numbers<[1], [0], [0], [1], [0, 0, 1, 1], [], []>} : vector<4x32xf32>, vector<32x128xf32>, vector<4x128xf32> -> vector<4x128xf32>
    %191 = arith.addf %189, %190 : vector<4x128xf32>
    %192 = math.tanh %191 : vector<4x128xf32>
    %193 = vector.broadcast %15 : vector<1x128xf32> to vector<4x128xf32>
    %194 = arith.mulf %192, %193 : vector<4x128xf32>
    %195 = vector.broadcast %18 : vector<1x128xf32> to vector<4x128xf32>
    %196 = arith.addf %194, %195 : vector<4x128xf32>
    %197 = vector.extract_strided_slice %196 {offsets = [0, 0], sizes = [4, 32], strides = [1, 1]} : vector<4x128xf32> to vector<4x32xf32>
    %198 = vector.extract_strided_slice %196 {offsets = [0, 32], sizes = [4, 32], strides = [1, 1]} : vector<4x128xf32> to vector<4x32xf32>
    %199 = vector.extract_strided_slice %196 {offsets = [0, 64], sizes = [4, 32], strides = [1, 1]} : vector<4x128xf32> to vector<4x32xf32>
    %200 = vector.extract_strided_slice %196 {offsets = [0, 96], sizes = [4, 32], strides = [1, 1]} : vector<4x128xf32> to vector<4x32xf32>
    %201 = arith.mulf %198, %162 : vector<4x32xf32>
    %202 = arith.mulf %197, %199 : vector<4x32xf32>
    %203 = arith.addf %201, %202 : vector<4x32xf32>
    %204 = math.tanh %203 : vector<4x32xf32>
    %205 = arith.mulf %200, %204 : vector<4x32xf32>
    %cst_30 = arith.constant dense<0.000000e+00> : vector<4x128xf32>
    %206 = tpu.matmul %183, %5, %cst_30 {dimension_numbers = #tpu.dot_dimension_numbers<[1], [0], [0], [1], [0, 0, 1, 1], [], []>} : vector<4x32xf32>, vector<32x128xf32>, vector<4x128xf32> -> vector<4x128xf32>
    %207 = vector.broadcast %6 : vector<1x128xf32> to vector<4x128xf32>
    %208 = arith.addf %206, %207 : vector<4x128xf32>
    %cst_31 = arith.constant dense<0.000000e+00> : vector<4x128xf32>
    %209 = tpu.matmul %205, %4, %cst_31 {dimension_numbers = #tpu.dot_dimension_numbers<[1], [0], [0], [1], [0, 0, 1, 1], [], []>} : vector<4x32xf32>, vector<32x128xf32>, vector<4x128xf32> -> vector<4x128xf32>
    %210 = arith.addf %208, %209 : vector<4x128xf32>
    %211 = math.tanh %210 : vector<4x128xf32>
    %212 = vector.broadcast %15 : vector<1x128xf32> to vector<4x128xf32>
    %213 = arith.mulf %211, %212 : vector<4x128xf32>
    %214 = vector.broadcast %18 : vector<1x128xf32> to vector<4x128xf32>
    %215 = arith.addf %213, %214 : vector<4x128xf32>
    %216 = vector.extract_strided_slice %215 {offsets = [0, 0], sizes = [4, 32], strides = [1, 1]} : vector<4x128xf32> to vector<4x32xf32>
    %217 = vector.extract_strided_slice %215 {offsets = [0, 32], sizes = [4, 32], strides = [1, 1]} : vector<4x128xf32> to vector<4x32xf32>
    %218 = vector.extract_strided_slice %215 {offsets = [0, 64], sizes = [4, 32], strides = [1, 1]} : vector<4x128xf32> to vector<4x32xf32>
    %219 = vector.extract_strided_slice %215 {offsets = [0, 96], sizes = [4, 32], strides = [1, 1]} : vector<4x128xf32> to vector<4x32xf32>
    %220 = arith.mulf %217, %181 : vector<4x32xf32>
    %221 = arith.mulf %216, %218 : vector<4x32xf32>
    %222 = arith.addf %220, %221 : vector<4x32xf32>
    %223 = math.tanh %222 : vector<4x32xf32>
    %224 = arith.mulf %219, %223 : vector<4x32xf32>
    %225 = vector.extract_strided_slice %0 {offsets = [0, 5], sizes = [4, 1], strides = [1, 1]} : vector<4x8xf32> to vector<4x1xf32>
    %226 = vector.broadcast %225 : vector<4x1xf32> to vector<4x128xf32>
    %227 = vector.broadcast %1 : vector<1x128xf32> to vector<4x128xf32>
    %228 = arith.mulf %226, %227 : vector<4x128xf32>
    %229 = vector.broadcast %2 : vector<1x128xf32> to vector<4x128xf32>
    %230 = arith.addf %228, %229 : vector<4x128xf32>
    %cst_32 = arith.constant dense<0.000000e+00> : vector<4x128xf32>
    %231 = tpu.matmul %205, %3, %cst_32 {dimension_numbers = #tpu.dot_dimension_numbers<[1], [0], [0], [1], [0, 0, 1, 1], [], []>} : vector<4x32xf32>, vector<32x128xf32>, vector<4x128xf32> -> vector<4x128xf32>
    %232 = arith.addf %230, %231 : vector<4x128xf32>
    %233 = math.tanh %232 : vector<4x128xf32>
    %234 = vector.broadcast %15 : vector<1x128xf32> to vector<4x128xf32>
    %235 = arith.mulf %233, %234 : vector<4x128xf32>
    %236 = vector.broadcast %18 : vector<1x128xf32> to vector<4x128xf32>
    %237 = arith.addf %235, %236 : vector<4x128xf32>
    %238 = vector.extract_strided_slice %237 {offsets = [0, 0], sizes = [4, 32], strides = [1, 1]} : vector<4x128xf32> to vector<4x32xf32>
    %239 = vector.extract_strided_slice %237 {offsets = [0, 32], sizes = [4, 32], strides = [1, 1]} : vector<4x128xf32> to vector<4x32xf32>
    %240 = vector.extract_strided_slice %237 {offsets = [0, 64], sizes = [4, 32], strides = [1, 1]} : vector<4x128xf32> to vector<4x32xf32>
    %241 = vector.extract_strided_slice %237 {offsets = [0, 96], sizes = [4, 32], strides = [1, 1]} : vector<4x128xf32> to vector<4x32xf32>
    %242 = arith.mulf %239, %203 : vector<4x32xf32>
    %243 = arith.mulf %238, %240 : vector<4x32xf32>
    %244 = arith.addf %242, %243 : vector<4x32xf32>
    %245 = math.tanh %244 : vector<4x32xf32>
    %246 = arith.mulf %241, %245 : vector<4x32xf32>
    %cst_33 = arith.constant dense<0.000000e+00> : vector<4x128xf32>
    %247 = tpu.matmul %224, %5, %cst_33 {dimension_numbers = #tpu.dot_dimension_numbers<[1], [0], [0], [1], [0, 0, 1, 1], [], []>} : vector<4x32xf32>, vector<32x128xf32>, vector<4x128xf32> -> vector<4x128xf32>
    %248 = vector.broadcast %6 : vector<1x128xf32> to vector<4x128xf32>
    %249 = arith.addf %247, %248 : vector<4x128xf32>
    %cst_34 = arith.constant dense<0.000000e+00> : vector<4x128xf32>
    %250 = tpu.matmul %246, %4, %cst_34 {dimension_numbers = #tpu.dot_dimension_numbers<[1], [0], [0], [1], [0, 0, 1, 1], [], []>} : vector<4x32xf32>, vector<32x128xf32>, vector<4x128xf32> -> vector<4x128xf32>
    %251 = arith.addf %249, %250 : vector<4x128xf32>
    %252 = math.tanh %251 : vector<4x128xf32>
    %253 = vector.broadcast %15 : vector<1x128xf32> to vector<4x128xf32>
    %254 = arith.mulf %252, %253 : vector<4x128xf32>
    %255 = vector.broadcast %18 : vector<1x128xf32> to vector<4x128xf32>
    %256 = arith.addf %254, %255 : vector<4x128xf32>
    %257 = vector.extract_strided_slice %256 {offsets = [0, 0], sizes = [4, 32], strides = [1, 1]} : vector<4x128xf32> to vector<4x32xf32>
    %258 = vector.extract_strided_slice %256 {offsets = [0, 32], sizes = [4, 32], strides = [1, 1]} : vector<4x128xf32> to vector<4x32xf32>
    %259 = vector.extract_strided_slice %256 {offsets = [0, 64], sizes = [4, 32], strides = [1, 1]} : vector<4x128xf32> to vector<4x32xf32>
    %260 = vector.extract_strided_slice %256 {offsets = [0, 96], sizes = [4, 32], strides = [1, 1]} : vector<4x128xf32> to vector<4x32xf32>
    %261 = arith.mulf %258, %222 : vector<4x32xf32>
    %262 = arith.mulf %257, %259 : vector<4x32xf32>
    %263 = arith.addf %261, %262 : vector<4x32xf32>
    %264 = math.tanh %263 : vector<4x32xf32>
    %265 = arith.mulf %260, %264 : vector<4x32xf32>
    %266 = vector.extract_strided_slice %0 {offsets = [0, 6], sizes = [4, 1], strides = [1, 1]} : vector<4x8xf32> to vector<4x1xf32>
    %267 = vector.broadcast %266 : vector<4x1xf32> to vector<4x128xf32>
    %268 = vector.broadcast %1 : vector<1x128xf32> to vector<4x128xf32>
    %269 = arith.mulf %267, %268 : vector<4x128xf32>
    %270 = vector.broadcast %2 : vector<1x128xf32> to vector<4x128xf32>
    %271 = arith.addf %269, %270 : vector<4x128xf32>
    %cst_35 = arith.constant dense<0.000000e+00> : vector<4x128xf32>
    %272 = tpu.matmul %246, %3, %cst_35 {dimension_numbers = #tpu.dot_dimension_numbers<[1], [0], [0], [1], [0, 0, 1, 1], [], []>} : vector<4x32xf32>, vector<32x128xf32>, vector<4x128xf32> -> vector<4x128xf32>
    %273 = arith.addf %271, %272 : vector<4x128xf32>
    %274 = math.tanh %273 : vector<4x128xf32>
    %275 = vector.broadcast %15 : vector<1x128xf32> to vector<4x128xf32>
    %276 = arith.mulf %274, %275 : vector<4x128xf32>
    %277 = vector.broadcast %18 : vector<1x128xf32> to vector<4x128xf32>
    %278 = arith.addf %276, %277 : vector<4x128xf32>
    %279 = vector.extract_strided_slice %278 {offsets = [0, 0], sizes = [4, 32], strides = [1, 1]} : vector<4x128xf32> to vector<4x32xf32>
    %280 = vector.extract_strided_slice %278 {offsets = [0, 32], sizes = [4, 32], strides = [1, 1]} : vector<4x128xf32> to vector<4x32xf32>
    %281 = vector.extract_strided_slice %278 {offsets = [0, 64], sizes = [4, 32], strides = [1, 1]} : vector<4x128xf32> to vector<4x32xf32>
    %282 = vector.extract_strided_slice %278 {offsets = [0, 96], sizes = [4, 32], strides = [1, 1]} : vector<4x128xf32> to vector<4x32xf32>
    %283 = arith.mulf %280, %244 : vector<4x32xf32>
    %284 = arith.mulf %279, %281 : vector<4x32xf32>
    %285 = arith.addf %283, %284 : vector<4x32xf32>
    %286 = math.tanh %285 : vector<4x32xf32>
    %287 = arith.mulf %282, %286 : vector<4x32xf32>
    %cst_36 = arith.constant dense<0.000000e+00> : vector<4x128xf32>
    %288 = tpu.matmul %265, %5, %cst_36 {dimension_numbers = #tpu.dot_dimension_numbers<[1], [0], [0], [1], [0, 0, 1, 1], [], []>} : vector<4x32xf32>, vector<32x128xf32>, vector<4x128xf32> -> vector<4x128xf32>
    %289 = vector.broadcast %6 : vector<1x128xf32> to vector<4x128xf32>
    %290 = arith.addf %288, %289 : vector<4x128xf32>
    %cst_37 = arith.constant dense<0.000000e+00> : vector<4x128xf32>
    %291 = tpu.matmul %287, %4, %cst_37 {dimension_numbers = #tpu.dot_dimension_numbers<[1], [0], [0], [1], [0, 0, 1, 1], [], []>} : vector<4x32xf32>, vector<32x128xf32>, vector<4x128xf32> -> vector<4x128xf32>
    %292 = arith.addf %290, %291 : vector<4x128xf32>
    %293 = math.tanh %292 : vector<4x128xf32>
    %294 = vector.broadcast %15 : vector<1x128xf32> to vector<4x128xf32>
    %295 = arith.mulf %293, %294 : vector<4x128xf32>
    %296 = vector.broadcast %18 : vector<1x128xf32> to vector<4x128xf32>
    %297 = arith.addf %295, %296 : vector<4x128xf32>
    %298 = vector.extract_strided_slice %297 {offsets = [0, 0], sizes = [4, 32], strides = [1, 1]} : vector<4x128xf32> to vector<4x32xf32>
    %299 = vector.extract_strided_slice %297 {offsets = [0, 32], sizes = [4, 32], strides = [1, 1]} : vector<4x128xf32> to vector<4x32xf32>
    %300 = vector.extract_strided_slice %297 {offsets = [0, 64], sizes = [4, 32], strides = [1, 1]} : vector<4x128xf32> to vector<4x32xf32>
    %301 = vector.extract_strided_slice %297 {offsets = [0, 96], sizes = [4, 32], strides = [1, 1]} : vector<4x128xf32> to vector<4x32xf32>
    %302 = arith.mulf %299, %263 : vector<4x32xf32>
    %303 = arith.mulf %298, %300 : vector<4x32xf32>
    %304 = arith.addf %302, %303 : vector<4x32xf32>
    %305 = math.tanh %304 : vector<4x32xf32>
    %306 = arith.mulf %301, %305 : vector<4x32xf32>
    %307 = vector.extract_strided_slice %0 {offsets = [0, 7], sizes = [4, 1], strides = [1, 1]} : vector<4x8xf32> to vector<4x1xf32>
    %308 = vector.broadcast %307 : vector<4x1xf32> to vector<4x128xf32>
    %309 = vector.broadcast %1 : vector<1x128xf32> to vector<4x128xf32>
    %310 = arith.mulf %308, %309 : vector<4x128xf32>
    %311 = vector.broadcast %2 : vector<1x128xf32> to vector<4x128xf32>
    %312 = arith.addf %310, %311 : vector<4x128xf32>
    %cst_38 = arith.constant dense<0.000000e+00> : vector<4x128xf32>
    %313 = tpu.matmul %287, %3, %cst_38 {dimension_numbers = #tpu.dot_dimension_numbers<[1], [0], [0], [1], [0, 0, 1, 1], [], []>} : vector<4x32xf32>, vector<32x128xf32>, vector<4x128xf32> -> vector<4x128xf32>
    %314 = arith.addf %312, %313 : vector<4x128xf32>
    %315 = math.tanh %314 : vector<4x128xf32>
    %316 = vector.broadcast %15 : vector<1x128xf32> to vector<4x128xf32>
    %317 = arith.mulf %315, %316 : vector<4x128xf32>
    %318 = vector.broadcast %18 : vector<1x128xf32> to vector<4x128xf32>
    %319 = arith.addf %317, %318 : vector<4x128xf32>
    %320 = vector.extract_strided_slice %319 {offsets = [0, 0], sizes = [4, 32], strides = [1, 1]} : vector<4x128xf32> to vector<4x32xf32>
    %321 = vector.extract_strided_slice %319 {offsets = [0, 32], sizes = [4, 32], strides = [1, 1]} : vector<4x128xf32> to vector<4x32xf32>
    %322 = vector.extract_strided_slice %319 {offsets = [0, 64], sizes = [4, 32], strides = [1, 1]} : vector<4x128xf32> to vector<4x32xf32>
    %323 = vector.extract_strided_slice %319 {offsets = [0, 96], sizes = [4, 32], strides = [1, 1]} : vector<4x128xf32> to vector<4x32xf32>
    %324 = arith.mulf %321, %285 : vector<4x32xf32>
    %325 = arith.mulf %320, %322 : vector<4x32xf32>
    %326 = arith.addf %324, %325 : vector<4x32xf32>
    %327 = math.tanh %326 : vector<4x32xf32>
    %328 = arith.mulf %323, %327 : vector<4x32xf32>
    %cst_39 = arith.constant dense<0.000000e+00> : vector<4x128xf32>
    %329 = tpu.matmul %306, %5, %cst_39 {dimension_numbers = #tpu.dot_dimension_numbers<[1], [0], [0], [1], [0, 0, 1, 1], [], []>} : vector<4x32xf32>, vector<32x128xf32>, vector<4x128xf32> -> vector<4x128xf32>
    %330 = vector.broadcast %6 : vector<1x128xf32> to vector<4x128xf32>
    %331 = arith.addf %329, %330 : vector<4x128xf32>
    %cst_40 = arith.constant dense<0.000000e+00> : vector<4x128xf32>
    %332 = tpu.matmul %328, %4, %cst_40 {dimension_numbers = #tpu.dot_dimension_numbers<[1], [0], [0], [1], [0, 0, 1, 1], [], []>} : vector<4x32xf32>, vector<32x128xf32>, vector<4x128xf32> -> vector<4x128xf32>
    %333 = arith.addf %331, %332 : vector<4x128xf32>
    %334 = math.tanh %333 : vector<4x128xf32>
    %335 = vector.broadcast %15 : vector<1x128xf32> to vector<4x128xf32>
    %336 = arith.mulf %334, %335 : vector<4x128xf32>
    %337 = vector.broadcast %18 : vector<1x128xf32> to vector<4x128xf32>
    %338 = arith.addf %336, %337 : vector<4x128xf32>
    %339 = vector.extract_strided_slice %338 {offsets = [0, 0], sizes = [4, 32], strides = [1, 1]} : vector<4x128xf32> to vector<4x32xf32>
    %340 = vector.extract_strided_slice %338 {offsets = [0, 32], sizes = [4, 32], strides = [1, 1]} : vector<4x128xf32> to vector<4x32xf32>
    %341 = vector.extract_strided_slice %338 {offsets = [0, 64], sizes = [4, 32], strides = [1, 1]} : vector<4x128xf32> to vector<4x32xf32>
    %342 = vector.extract_strided_slice %338 {offsets = [0, 96], sizes = [4, 32], strides = [1, 1]} : vector<4x128xf32> to vector<4x32xf32>
    %343 = arith.mulf %340, %304 : vector<4x32xf32>
    %344 = arith.mulf %339, %341 : vector<4x32xf32>
    %345 = arith.addf %343, %344 : vector<4x32xf32>
    %346 = math.tanh %345 : vector<4x32xf32>
    %347 = arith.mulf %342, %346 : vector<4x32xf32>
    %c0_41 = arith.constant 0 : index
    %c0_42 = arith.constant 0 : index
    %348 = vector.load %arg8[%c0_41, %c0_42] : memref<32x128xf32, #tpu.memory_space<vmem>>, vector<32x128xf32>
    %cst_43 = arith.constant dense<0.000000e+00> : vector<4x128xf32>
    %349 = tpu.matmul %347, %348, %cst_43 {dimension_numbers = #tpu.dot_dimension_numbers<[1], [0], [0], [1], [0, 0, 1, 1], [], []>} : vector<4x32xf32>, vector<32x128xf32>, vector<4x128xf32> -> vector<4x128xf32>
    %c0_44 = arith.constant 0 : index
    %c0_45 = arith.constant 0 : index
    %350 = vector.load %arg9[%c0_44, %c0_45] : memref<1x128xf32, #tpu.memory_space<vmem>>, vector<1x128xf32>
    %351 = vector.broadcast %350 : vector<1x128xf32> to vector<4x128xf32>
    %352 = arith.addf %349, %351 : vector<4x128xf32>
    %c0_46 = arith.constant 0 : index
    %c0_47 = arith.constant 0 : index
    %353 = vector.load %arg10[%c0_46, %c0_47] : memref<4x128xf32, #tpu.memory_space<vmem>>, vector<4x128xf32>
    tpu.vector_store %arg10[%c0_46, %c0_47], %352 {strides = array<i32>} : memref<4x128xf32, #tpu.memory_space<vmem>>, vector<4x128xf32>,
    return
  }
  func.func @transform_0(%arg0: i32) -> (i32, i32) {
    %c0_i32 = arith.constant 0 : i32
    %c0_i32_0 = arith.constant 0 : i32
    return %arg0, %c0_i32 : i32, i32
  }
  func.func @transform_1(%arg0: i32) -> (i32, i32) {
    %c0_i32 = arith.constant 0 : i32
    %c0_i32_0 = arith.constant 0 : i32
    %c0_i32_1 = arith.constant 0 : i32
    return %c0_i32, %c0_i32_0 : i32, i32
  }
  func.func @transform_2(%arg0: i32) -> (i32, i32) {
    %c0_i32 = arith.constant 0 : i32
    %c0_i32_0 = arith.constant 0 : i32
    %c0_i32_1 = arith.constant 0 : i32
    return %c0_i32, %c0_i32_0 : i32, i32
  }
  func.func @transform_3(%arg0: i32) -> (i32, i32) {
    %c0_i32 = arith.constant 0 : i32
    %c0_i32_0 = arith.constant 0 : i32
    %c0_i32_1 = arith.constant 0 : i32
    return %c0_i32, %c0_i32_0 : i32, i32
  }
  func.func @transform_4(%arg0: i32) -> (i32, i32) {
    %c0_i32 = arith.constant 0 : i32
    %c0_i32_0 = arith.constant 0 : i32
    %c0_i32_1 = arith.constant 0 : i32
    return %c0_i32, %c0_i32_0 : i32, i32
  }
  func.func @transform_5(%arg0: i32) -> (i32, i32) {
    %c0_i32 = arith.constant 0 : i32
    %c0_i32_0 = arith.constant 0 : i32
    %c0_i32_1 = arith.constant 0 : i32
    return %c0_i32, %c0_i32_0 : i32, i32
  }
  func.func @transform_6(%arg0: i32) -> (i32, i32) {
    %c0_i32 = arith.constant 0 : i32
    %c0_i32_0 = arith.constant 0 : i32
    %c0_i32_1 = arith.constant 0 : i32
    return %c0_i32, %c0_i32_0 : i32, i32
  }
  func.func @transform_7(%arg0: i32) -> (i32, i32) {
    %c0_i32 = arith.constant 0 : i32
    %c0_i32_0 = arith.constant 0 : i32
    %c0_i32_1 = arith.constant 0 : i32
    return %c0_i32, %c0_i32_0 : i32, i32
  }
  func.func @transform_8(%arg0: i32) -> (i32, i32) {
    %c0_i32 = arith.constant 0 : i32
    %c0_i32_0 = arith.constant 0 : i32
    %c0_i32_1 = arith.constant 0 : i32
    return %c0_i32, %c0_i32_0 : i32, i32
  }
  func.func @transform_9(%arg0: i32) -> (i32, i32) {
    %c0_i32 = arith.constant 0 : i32
    %c0_i32_0 = arith.constant 0 : i32
    return %arg0, %c0_i32 : i32, i32
  }
}

</mosaic_0001>

<llo_original>
// kernel: tpu_custom_call.1
$region0: #{tpu_custom_call.1}
  #allocation0 [shape = 'u32[]', space=smem, size = 0x4, offset = 0x4, fixed_abs, tag = 'smem constant byte address 0x4 - core index']
  #allocation1 [shape = 'u32[72,128]{1,0:T(1,128)}', space=vmem, size = 0x9000, scoped, tag = 'internal scratch']
  %s0 = inlined_call_operand.hbm [shape: f32[4,8], index: 0, kind: input, shape index: {}]
  %s1 = inlined_call_operand.hbm [shape: f32[1,128], index: 1, kind: input, shape index: {}]
  %s2 = inlined_call_operand.vmem [shape: f32[1,128], index: 2, kind: input, shape index: {}]
  %s3 = inlined_call_operand.hbm [shape: f32[32,128], index: 3, kind: input, shape index: {}]
  %s4 = inlined_call_operand.hbm [shape: f32[32,128], index: 4, kind: input, shape index: {}]
  %s5 = inlined_call_operand.hbm [shape: f32[32,128], index: 5, kind: input, shape index: {}]
  %s6 = inlined_call_operand.vmem [shape: f32[1,128], index: 6, kind: input, shape index: {}]
  %s7 = inlined_call_operand.hbm [shape: f32[32,128], index: 7, kind: input, shape index: {}]
  %s8 = inlined_call_operand.vmem [shape: f32[1,128], index: 8, kind: input, shape index: {}]
  %s9 = inlined_call_operand.hbm [shape: f32[4,128], index: 9, kind: output, shape index: {}]
  %s10 = sld [smem:[#allocation0]]
  $region70: #{tpu_custom_call.1} parent=0
    _
  %s12 = ssub.s32 1, %s10
  %s13 = scalar_select 0, %s12, %s10
  $region1: #{tpu_custom_call.1} parent=0
    #allocation2 [shape = 'u8[2048]{0}', space=vmem, size = 0x800, scoped, tag = 'input window, operand 0, single buffered']
    #allocation3 [shape = 's32[1]{0}', space=sflag, size = 0x4, scoped, tag = 'scoped memory for tpu_custom_call.1']
    #allocation4 [shape = 's32[1]{0}', space=sflag, size = 0x4, scoped, tag = 'scoped memory for tpu_custom_call.1']
    #allocation5 [shape = 'u8[512]{0}', space=vmem, size = 0x400, scoped, tag = 'input window, operand 1, single buffered']
    #allocation6 [shape = 's32[1]{0}', space=sflag, size = 0x4, scoped, tag = 'scoped memory for tpu_custom_call.1']
    #allocation7 [shape = 'u8[16384]{0}', space=vmem, size = 0x4000, scoped, tag = 'input window, operand 3, single buffered']
    #allocation8 [shape = 'u8[16384]{0}', space=vmem, size = 0x4000, scoped, tag = 'input window, operand 4, single buffered']
    #allocation9 [shape = 's32[1]{0}', space=sflag, size = 0x4, scoped, tag = 'scoped memory for tpu_custom_call.1']
    #allocation10 [shape = 'u8[16384]{0}', space=vmem, size = 0x4000, scoped, tag = 'input window, operand 5, single buffered']
    #allocation11 [shape = 'u8[16384]{0}', space=vmem, size = 0x4000, scoped, tag = 'input window, operand 7, single buffered']
    #allocation12 [shape = 's32[1]{0}', space=sflag, size = 0x4, scoped, tag = 'scoped memory for tpu_custom_call.1']
    #allocation13 [shape = 'u8[2048]{0}', space=vmem, size = 0x800, scoped, tag = 'output window, operand 0, single buffered']
    %14 = vsyncpa [#allocation3], 0
    %15 = vsyncpa [#allocation6], 0
    %16 = vsyncpa [#allocation9], 0
    %17 = vsyncpa [#allocation12], 0
    %18 = vsyncpa [#allocation4], 0
    // Predicated region
    $region2: #{tpu_custom_call.1} parent=1 // pred_check
      _
    $region3: #{tpu_custom_call.1} parent=1 // pred_check_branch
      %20 = sbr.rel (0) target = $region5
    $region4: #{tpu_custom_call.1} parent=1 // pred_region
      %22 = vsyncadd [#allocation3], 0
      %s24 = sshll.u32 %s0, 4
      %s25 = int_to_ptr.hbm [resolvable:$true] %s24
      %s26 = sshll.u32 [#allocation2], 4
      %s27 = int_to_ptr.vmem [resolvable:$true] %s26
      %29 = dma.hbm_to_vmem [thread:$0]  %s25, 64, %s27, [#allocation3]
    $region5: #{tpu_custom_call.1} parent=1 // pred_fallthru
      _
    // Predicated region
    $region6: #{tpu_custom_call.1} parent=1 // pred_check
      _
    $region7: #{tpu_custom_call.1} parent=1 // pred_check_branch
      %31 = sbr.rel (0) target = $region9
    $region8: #{tpu_custom_call.1} parent=1 // pred_region
      %33 = vsyncadd [#allocation6], 0
      %s35 = sshll.u32 %s1, 4
      %s36 = int_to_ptr.hbm [resolvable:$true] %s35
      %s37 = sshll.u32 [#allocation5], 4
      %s38 = int_to_ptr.vmem [resolvable:$true] %s37
      %40 = dma.hbm_to_vmem [thread:$0]  %s36, 16, %s38, [#allocation6]
    $region9: #{tpu_custom_call.1} parent=1 // pred_fallthru
      _
    // Predicated region
    $region10: #{tpu_custom_call.1} parent=1 // pred_check
      _
    $region11: #{tpu_custom_call.1} parent=1 // pred_check_branch
      %42 = sbr.rel (0) target = $region13
    $region12: #{tpu_custom_call.1} parent=1 // pred_region
      _
    $region13: #{tpu_custom_call.1} parent=1 // pred_fallthru
      _
    // Predicated region
    $region14: #{tpu_custom_call.1} parent=1 // pred_check
      _
    $region15: #{tpu_custom_call.1} parent=1 // pred_check_branch
      %44 = sbr.rel (0) target = $region17
    $region16: #{tpu_custom_call.1} parent=1 // pred_region
      %46 = vsyncadd [#allocation6], 0
      %s47 = sshll.u32 %s3, 4
      %s48 = int_to_ptr.hbm [resolvable:$true] %s47
      %s49 = sshll.u32 [#allocation7], 4
      %s50 = int_to_ptr.vmem [resolvable:$true] %s49
      %55 = dma.hbm_to_vmem [thread:$0]  %s48, 512, %s50, [#allocation6], 128, 128, 8
    $region17: #{tpu_custom_call.1} parent=1 // pred_fallthru
      _
    // Predicated region
    $region18: #{tpu_custom_call.1} parent=1 // pred_check
      _
    $region19: #{tpu_custom_call.1} parent=1 // pred_check_branch
      %57 = sbr.rel (0) target = $region21
    $region20: #{tpu_custom_call.1} parent=1 // pred_region
      %59 = vsyncadd [#allocation9], 0
      %s60 = sshll.u32 %s4, 4
      %s61 = int_to_ptr.hbm [resolvable:$true] %s60
      %s62 = sshll.u32 [#allocation8], 4
      %s63 = int_to_ptr.vmem [resolvable:$true] %s62
      %68 = dma.hbm_to_vmem [thread:$0]  %s61, 512, %s63, [#allocation9], 128, 128, 8
    $region21: #{tpu_custom_call.1} parent=1 // pred_fallthru
      _
    // Predicated region
    $region22: #{tpu_custom_call.1} parent=1 // pred_check
      _
    $region23: #{tpu_custom_call.1} parent=1 // pred_check_branch
      %70 = sbr.rel (0) target = $region25
    $region24: #{tpu_custom_call.1} parent=1 // pred_region
      %72 = vsyncadd [#allocation9], 0
      %s73 = sshll.u32 %s5, 4
      %s74 = int_to_ptr.hbm [resolvable:$true] %s73
      %s75 = sshll.u32 [#allocation10], 4
      %s76 = int_to_ptr.vmem [resolvable:$true] %s75
      %81 = dma.hbm_to_vmem [thread:$0]  %s74, 512, %s76, [#allocation9], 128, 128, 8
    $region25: #{tpu_custom_call.1} parent=1 // pred_fallthru
      _
    // Predicated region
    $region26: #{tpu_custom_call.1} parent=1 // pred_check
      _
    $region27: #{tpu_custom_call.1} parent=1 // pred_check_branch
      %83 = sbr.rel (0) target = $region29
    $region28: #{tpu_custom_call.1} parent=1 // pred_region
      _
    $region29: #{tpu_custom_call.1} parent=1 // pred_fallthru
      _
    // Predicated region
    $region30: #{tpu_custom_call.1} parent=1 // pred_check
      _
    $region31: #{tpu_custom_call.1} parent=1 // pred_check_branch
      %85 = sbr.rel (0) target = $region33
    $region32: #{tpu_custom_call.1} parent=1 // pred_region
      %87 = vsyncadd [#allocation12], 0
      %s88 = sshll.u32 %s7, 4
      %s89 = int_to_ptr.hbm [resolvable:$true] %s88
      %s90 = sshll.u32 [#allocation11], 4
      %s91 = int_to_ptr.vmem [resolvable:$true] %s90
      %96 = dma.hbm_to_vmem [thread:$0]  %s89, 512, %s91, [#allocation12], 128, 128, 8
    $region33: #{tpu_custom_call.1} parent=1 // pred_fallthru
      _
    // Predicated region
    $region34: #{tpu_custom_call.1} parent=1 // pred_check
      _
    $region35: #{tpu_custom_call.1} parent=1 // pred_check_branch
      %98 = sbr.rel (0) target = $region37
    $region36: #{tpu_custom_call.1} parent=1 // pred_region
      _
    $region37: #{tpu_custom_call.1} parent=1 // pred_fallthru
      _
    // Predicated region
    $region38: #{tpu_custom_call.1} parent=1 // pred_check
      _
    $region39: #{tpu_custom_call.1} parent=1 // pred_check_branch
      %100 = sbr.rel (0) target = $region41
    $region40: #{tpu_custom_call.1} parent=1 // pred_region
      %102 = dma.done [#allocation3], 64
    $region41: #{tpu_custom_call.1} parent=1 // pred_fallthru
      _
    // Predicated region
    $region42: #{tpu_custom_call.1} parent=1 // pred_check
      _
    $region43: #{tpu_custom_call.1} parent=1 // pred_check_branch
      %104 = sbr.rel (0) target = $region45
    $region44: #{tpu_custom_call.1} parent=1 // pred_region
      %106 = dma.done [#allocation6], 16
    $region45: #{tpu_custom_call.1} parent=1 // pred_fallthru
      _
    // Predicated region
    $region46: #{tpu_custom_call.1} parent=1 // pred_check
      _
    $region47: #{tpu_custom_call.1} parent=1 // pred_check_branch
      %108 = sbr.rel (0) target = $region49
    $region48: #{tpu_custom_call.1} parent=1 // pred_region
      %110 = dma.done [#allocation6], 512
    $region49: #{tpu_custom_call.1} parent=1 // pred_fallthru
      _
    // Predicated region
    $region50: #{tpu_custom_call.1} parent=1 // pred_check
      _
    $region51: #{tpu_custom_call.1} parent=1 // pred_check_branch
      %112 = sbr.rel (0) target = $region53
    $region52: #{tpu_custom_call.1} parent=1 // pred_region
      %114 = dma.done [#allocation9], 512
    $region53: #{tpu_custom_call.1} parent=1 // pred_fallthru
      _
    // Predicated region
    $region54: #{tpu_custom_call.1} parent=1 // pred_check
      _
    $region55: #{tpu_custom_call.1} parent=1 // pred_check_branch
      %116 = sbr.rel (0) target = $region57
    $region56: #{tpu_custom_call.1} parent=1 // pred_region
      %118 = dma.done [#allocation9], 512
    $region57: #{tpu_custom_call.1} parent=1 // pred_fallthru
      _
    // Predicated region
    $region58: #{tpu_custom_call.1} parent=1 // pred_check
      _
    $region59: #{tpu_custom_call.1} parent=1 // pred_check_branch
      %120 = sbr.rel (0) target = $region61
    $region60: #{tpu_custom_call.1} parent=1 // pred_region
      %122 = dma.done [#allocation12], 512
    $region61: #{tpu_custom_call.1} parent=1 // pred_fallthru
      _
    %v123 = vld [vmem:[#allocation2] sm:$0xf]
    %v124 = vld [vmem:[#allocation5] sm:$0x1]
    %v125 = vld [vmem:[%s2] sm:$0x1]
    %v126 = vld [vmem:[#allocation7] sm:$0xff]
    %v127 = vld [vmem:[#allocation7 + $0x8] sm:$0xff]
    %v128 = vld [vmem:[#allocation7 + $0x10] sm:$0xff]
    %v129 = vld [vmem:[#allocation7 + $0x18] sm:$0xff]
    %v130 = vld [vmem:[#allocation8] sm:$0xff]
    %v131 = vld [vmem:[#allocation8 + $0x8] sm:$0xff]
    %v132 = vld [vmem:[#allocation8 + $0x10] sm:$0xff]
    %v133 = vld [vmem:[#allocation8 + $0x18] sm:$0xff]
    %v134 = vld [vmem:[#allocation10] sm:$0xff]
    %v135 = vld [vmem:[#allocation10 + $0x8] sm:$0xff]
    %v136 = vld [vmem:[#allocation10 + $0x10] sm:$0xff]
    %v137 = vld [vmem:[#allocation10 + $0x18] sm:$0xff]
    %v138 = vld [vmem:[%s6] sm:$0x1]
    %v139 = vlaneseq
    %v140 = vand.u32 %v139, 127
    %vm141 = vcmp.ge.s32.totalorder %v140, 64
    %vm142 = vcmp.lt.s32.totalorder %v140, 96
    %vm143 = vmand %vm141, %vm142
    %v144 = vsel %vm143, 1.0, 0.5
    %v145 = vsel %vm143, 0.0, 0.5
    %147 = vset.pattern.permute.xlu0 0
    %148 = vperm.xlu0 %147, %v123
    %v149 = vpop.permute.xlu0 %148
    %v152 = vperm.slane %v124, 0
    %v154 = vmul.f32 %v149, %v152
    %v156 = vperm.slane %v125, 0
    %v158 = vadd.f32 %v154, %v156
    %vm159 = vcmask 261120
    %v161 = vsel %vm159, 0.0, 0
    %163 = vmatpush.msra.mxu0 0.0
    %164 = vmatpush.msra.mxu0 0.0
    %165 = vmatpush.msra.mxu0 0.0
    %166 = vmatpush.msra.mxu0 0.0
    %167 = vmatpush.msra.mxu0 0.0
    %168 = vmatpush.msra.mxu0 0.0
    %169 = vmatpush.msra.mxu0 0.0
    %170 = vmatpush.msra.mxu0 0.0
    %171 = vmatpush.msra.mxu0 0.0
    %172 = vmatpush.msra.mxu0 0.0
    %173 = vmatpush.msra.mxu0 0.0
    %174 = vmatpush.msra.mxu0 0.0
    %175 = vmatpush.msra.mxu0 %v129
    %176 = vmatpush.msra.mxu0 %v128
    %177 = vmatpush.msra.mxu0 %v127
    %178 = vmatpush.msra.mxu0 %v126
    %179 = vmatmul.f32.gmra.mxu0 %v161
    %v180 = vpop.f32.mrf.mxu0
    %v181 = vadd.f32 0.0, %v180
    %182 = vdwg.mxu0
    %v183 = vadd.f32 %v158, %v181
    %v184 = vtanh.pop %v183
    %v185 = vmul.f32 %v184, %v144
    %v186 = vadd.f32 %v185, %v145
    %v187 = vmul.f32 %v186, 0.0
    %189 = vrot.lane.b32.xlu0 %v186, 64
    %v190 = vpop.permute.xlu0 %189
    %v192 = vmul.f32 %v186, %v190
    %194 = vrot.lane.b32.xlu0 %v192, 32
    %v195 = vpop.permute.xlu0 %194
    %v197 = vadd.f32 %v187, %v195
    %v198 = vtanh.pop %v197
    %200 = vrot.lane.b32.xlu0 %v198, 64
    %v201 = vpop.permute.xlu0 %200
    %v203 = vmul.f32 %v186, %v201
    %v205 = vperm.slane %v138, 0
    %207 = vmatpush.msra.mxu0 0.0
    %208 = vmatpush.msra.mxu0 0.0
    %209 = vmatpush.msra.mxu0 0.0
    %210 = vmatpush.msra.mxu0 0.0
    %211 = vmatpush.msra.mxu0 0.0
    %212 = vmatpush.msra.mxu0 0.0
    %213 = vmatpush.msra.mxu0 0.0
    %214 = vmatpush.msra.mxu0 0.0
    %215 = vmatpush.msra.mxu0 0.0
    %216 = vmatpush.msra.mxu0 0.0
    %217 = vmatpush.msra.mxu0 0.0
    %218 = vmatpush.msra.mxu0 0.0
    %219 = vmatpush.msra.mxu0 %v137
    %220 = vmatpush.msra.mxu0 %v136
    %221 = vmatpush.msra.mxu0 %v135
    %222 = vmatpush.msra.mxu0 %v134
    %223 = vmatmul.f32.gmra.mxu0 %v161
    %v224 = vpop.f32.mrf.mxu0
    %v225 = vadd.f32 %v205, %v224
    %226 = vdwg.mxu0
    %228 = vrot.lane.b32.xlu0 %v203, 32
    %v229 = vpop.permute.xlu0 %228
    %v230 = vsel %vm159, %v229, 0
    %232 = vmatpush.msra.mxu0 0.0
    %233 = vmatpush.msra.mxu0 0.0
    %234 = vmatpush.msra.mxu0 0.0
    %235 = vmatpush.msra.mxu0 0.0
    %236 = vmatpush.msra.mxu0 0.0
    %237 = vmatpush.msra.mxu0 0.0
    %238 = vmatpush.msra.mxu0 0.0
    %239 = vmatpush.msra.mxu0 0.0
    %240 = vmatpush.msra.mxu0 0.0
    %241 = vmatpush.msra.mxu0 0.0
    %242 = vmatpush.msra.mxu0 0.0
    %243 = vmatpush.msra.mxu0 0.0
    %244 = vmatpush.msra.mxu0 %v133
    %245 = vmatpush.msra.mxu0 %v132
    %246 = vmatpush.msra.mxu0 %v131
    %247 = vmatpush.msra.mxu0 %v130
    %248 = vmatmul.f32.gmra.mxu0 %v230
    %v249 = vpop.f32.mrf.mxu0
    %v250 = vadd.f32 0.0, %v249
    %251 = vdwg.mxu0
    %v252 = vadd.f32 %v225, %v250
    %v253 = vtanh.pop %v252
    %v254 = vmul.f32 %v253, %v144
    %v255 = vadd.f32 %v254, %v145
    %v256 = vmul.f32 %v255, 0.0
    %258 = vrot.lane.b32.xlu0 %v255, 64
    %v259 = vpop.permute.xlu0 %258
    %v261 = vmul.f32 %v255, %v259
    %263 = vrot.lane.b32.xlu0 %v261, 32
    %v264 = vpop.permute.xlu0 %263
    %v266 = vadd.f32 %v256, %v264
    %v267 = vtanh.pop %v266
    %269 = vrot.lane.b32.xlu0 %v267, 64
    %v270 = vpop.permute.xlu0 %269
    %v272 = vmul.f32 %v255, %v270
    %273 = vset.pattern.permute.xlu0 1
    %274 = vperm.xlu0 %273, %v123
    %v275 = vpop.permute.xlu0 %274
    %v277 = vmul.f32 %v275, %v152
    %v278 = vadd.f32 %v277, %v156
    %279 = vmatpush.msra.mxu0 0.0
    %280 = vmatpush.msra.mxu0 0.0
    %281 = vmatpush.msra.mxu0 0.0
    %282 = vmatpush.msra.mxu0 0.0
    %283 = vmatpush.msra.mxu0 0.0
    %284 = vmatpush.msra.mxu0 0.0
    %285 = vmatpush.msra.mxu0 0.0
    %286 = vmatpush.msra.mxu0 0.0
    %287 = vmatpush.msra.mxu0 0.0
    %288 = vmatpush.msra.mxu0 0.0
    %289 = vmatpush.msra.mxu0 0.0
    %290 = vmatpush.msra.mxu0 0.0
    %291 = vmatpush.msra.mxu0 %v129
    %292 = vmatpush.msra.mxu0 %v128
    %293 = vmatpush.msra.mxu0 %v127
    %294 = vmatpush.msra.mxu0 %v126
    %295 = vmatmul.f32.gmra.mxu0 %v230
    %v296 = vpop.f32.mrf.mxu0
    %v297 = vadd.f32 0.0, %v296
    %298 = vdwg.mxu0
    %v299 = vadd.f32 %v278, %v297
    %v300 = vtanh.pop %v299
    %v301 = vmul.f32 %v300, %v144
    %v302 = vadd.f32 %v301, %v145
    %v303 = vmul.f32 %v302, %v197
    %305 = vrot.lane.b32.xlu0 %v302, 64
    %v306 = vpop.permute.xlu0 %305
    %v308 = vmul.f32 %v302, %v306
    %310 = vrot.lane.b32.xlu0 %v308, 32
    %v311 = vpop.permute.xlu0 %310
    %v313 = vadd.f32 %v303, %v311
    %v314 = vtanh.pop %v313
    %316 = vrot.lane.b32.xlu0 %v314, 64
    %v317 = vpop.permute.xlu0 %316
    %v319 = vmul.f32 %v302, %v317
    %321 = vrot.lane.b32.xlu0 %v272, 32
    %v322 = vpop.permute.xlu0 %321
    %v323 = vsel %vm159, %v322, 0
    %325 = vmatpush.msra.mxu0 0.0
    %326 = vmatpush.msra.mxu0 0.0
    %327 = vmatpush.msra.mxu0 0.0
    %328 = vmatpush.msra.mxu0 0.0
    %329 = vmatpush.msra.mxu0 0.0
    %330 = vmatpush.msra.mxu0 0.0
    %331 = vmatpush.msra.mxu0 0.0
    %332 = vmatpush.msra.mxu0 0.0
    %333 = vmatpush.msra.mxu0 0.0
    %334 = vmatpush.msra.mxu0 0.0
    %335 = vmatpush.msra.mxu0 0.0
    %336 = vmatpush.msra.mxu0 0.0
    %337 = vmatpush.msra.mxu0 %v137
    %338 = vmatpush.msra.mxu0 %v136
    %339 = vmatpush.msra.mxu0 %v135
    %340 = vmatpush.msra.mxu0 %v134
    %341 = vmatmul.f32.gmra.mxu0 %v323
    %v342 = vpop.f32.mrf.mxu0
    %v343 = vadd.f32 %v205, %v342
    %344 = vdwg.mxu0
    %346 = vrot.lane.b32.xlu0 %v319, 32
    %v347 = vpop.permute.xlu0 %346
    %v348 = vsel %vm159, %v347, 0
    %350 = vmatpush.msra.mxu0 0.0
    %351 = vmatpush.msra.mxu0 0.0
    %352 = vmatpush.msra.mxu0 0.0
    %353 = vmatpush.msra.mxu0 0.0
    %354 = vmatpush.msra.mxu0 0.0
    %355 = vmatpush.msra.mxu0 0.0
    %356 = vmatpush.msra.mxu0 0.0
    %357 = vmatpush.msra.mxu0 0.0
    %358 = vmatpush.msra.mxu0 0.0
    %359 = vmatpush.msra.mxu0 0.0
    %360 = vmatpush.msra.mxu0 0.0
    %361 = vmatpush.msra.mxu0 0.0
    %362 = vmatpush.msra.mxu0 %v133
    %363 = vmatpush.msra.mxu0 %v132
    %364 = vmatpush.msra.mxu0 %v131
    %365 = vmatpush.msra.mxu0 %v130
    %366 = vmatmul.f32.gmra.mxu0 %v348
    %v367 = vpop.f32.mrf.mxu0
    %v368 = vadd.f32 0.0, %v367
    %369 = vdwg.mxu0
    %v370 = vadd.f32 %v343, %v368
    %v371 = vtanh.pop %v370
    %v372 = vmul.f32 %v371, %v144
    %v373 = vadd.f32 %v372, %v145
    %v374 = vmul.f32 %v373, %v266
    %376 = vrot.lane.b32.xlu0 %v373, 64
    %v377 = vpop.permute.xlu0 %376
    %v379 = vmul.f32 %v373, %v377
    %381 = vrot.lane.b32.xlu0 %v379, 32
    %v382 = vpop.permute.xlu0 %381
    %v384 = vadd.f32 %v374, %v382
    %v385 = vtanh.pop %v384
    %387 = vrot.lane.b32.xlu0 %v385, 64
    %v388 = vpop.permute.xlu0 %387
    %v390 = vmul.f32 %v373, %v388
    %391 = vset.pattern.permute.xlu0 2
    %392 = vperm.xlu0 %391, %v123
    %v393 = vpop.permute.xlu0 %392
    %v395 = vmul.f32 %v393, %v152
    %v396 = vadd.f32 %v395, %v156
    %397 = vmatpush.msra.mxu0 0.0
    %398 = vmatpush.msra.mxu0 0.0
    %399 = vmatpush.msra.mxu0 0.0
    %400 = vmatpush.msra.mxu0 0.0
    %401 = vmatpush.msra.mxu0 0.0
    %402 = vmatpush.msra.mxu0 0.0
    %403 = vmatpush.msra.mxu0 0.0
    %404 = vmatpush.msra.mxu0 0.0
    %405 = vmatpush.msra.mxu0 0.0
    %406 = vmatpush.msra.mxu0 0.0
    %407 = vmatpush.msra.mxu0 0.0
    %408 = vmatpush.msra.mxu0 0.0
    %409 = vmatpush.msra.mxu0 %v129
    %410 = vmatpush.msra.mxu0 %v128
    %411 = vmatpush.msra.mxu0 %v127
    %412 = vmatpush.msra.mxu0 %v126
    %413 = vmatmul.f32.gmra.mxu0 %v348
    %v414 = vpop.f32.mrf.mxu0
    %v415 = vadd.f32 0.0, %v414
    %416 = vdwg.mxu0
    %v417 = vadd.f32 %v396, %v415
    %v418 = vtanh.pop %v417
    %v419 = vmul.f32 %v418, %v144
    %v420 = vadd.f32 %v419, %v145
    %v421 = vmul.f32 %v420, %v313
    %423 = vrot.lane.b32.xlu0 %v420, 64
    %v424 = vpop.permute.xlu0 %423
    %v426 = vmul.f32 %v420, %v424
    %428 = vrot.lane.b32.xlu0 %v426, 32
    %v429 = vpop.permute.xlu0 %428
    %v431 = vadd.f32 %v421, %v429
    %v432 = vtanh.pop %v431
    %434 = vrot.lane.b32.xlu0 %v432, 64
    %v435 = vpop.permute.xlu0 %434
    %v437 = vmul.f32 %v420, %v435
    %439 = vrot.lane.b32.xlu0 %v390, 32
    %v440 = vpop.permute.xlu0 %439
    %v441 = vsel %vm159, %v440, 0
    %443 = vmatpush.msra.mxu0 0.0
    %444 = vmatpush.msra.mxu0 0.0
    %445 = vmatpush.msra.mxu0 0.0
    %446 = vmatpush.msra.mxu0 0.0
    %447 = vmatpush.msra.mxu0 0.0
    %448 = vmatpush.msra.mxu0 0.0
    %449 = vmatpush.msra.mxu0 0.0
    %450 = vmatpush.msra.mxu0 0.0
    %451 = vmatpush.msra.mxu0 0.0
    %452 = vmatpush.msra.mxu0 0.0
    %453 = vmatpush.msra.mxu0 0.0
    %454 = vmatpush.msra.mxu0 0.0
    %455 = vmatpush.msra.mxu0 %v137
    %456 = vmatpush.msra.mxu0 %v136
    %457 = vmatpush.msra.mxu0 %v135
    %458 = vmatpush.msra.mxu0 %v134
    %459 = vmatmul.f32.gmra.mxu0 %v441
    %v460 = vpop.f32.mrf.mxu0
    %v461 = vadd.f32 %v205, %v460
    %462 = vdwg.mxu0
    %464 = vrot.lane.b32.xlu0 %v437, 32
    %v465 = vpop.permute.xlu0 %464
    %v466 = vsel %vm159, %v465, 0
    %468 = vmatpush.msra.mxu0 0.0
    %469 = vmatpush.msra.mxu0 0.0
    %470 = vmatpush.msra.mxu0 0.0
    %471 = vmatpush.msra.mxu0 0.0
    %472 = vmatpush.msra.mxu0 0.0
    %473 = vmatpush.msra.mxu0 0.0
    %474 = vmatpush.msra.mxu0 0.0
    %475 = vmatpush.msra.mxu0 0.0
    %476 = vmatpush.msra.mxu0 0.0
    %477 = vmatpush.msra.mxu0 0.0
    %478 = vmatpush.msra.mxu0 0.0
    %479 = vmatpush.msra.mxu0 0.0
    %480 = vmatpush.msra.mxu0 %v133
    %481 = vmatpush.msra.mxu0 %v132
    %482 = vmatpush.msra.mxu0 %v131
    %483 = vmatpush.msra.mxu0 %v130
    %484 = vmatmul.f32.gmra.mxu0 %v466
    %v485 = vpop.f32.mrf.mxu0
    %v486 = vadd.f32 0.0, %v485
    %487 = vdwg.mxu0
    %v488 = vadd.f32 %v461, %v486
    %v489 = vtanh.pop %v488
    %v490 = vmul.f32 %v489, %v144
    %v491 = vadd.f32 %v490, %v145
    %v492 = vmul.f32 %v491, %v384
    %494 = vrot.lane.b32.xlu0 %v491, 64
    %v495 = vpop.permute.xlu0 %494
    %v497 = vmul.f32 %v491, %v495
    %499 = vrot.lane.b32.xlu0 %v497, 32
    %v500 = vpop.permute.xlu0 %499
    %v502 = vadd.f32 %v492, %v500
    %v503 = vtanh.pop %v502
    %505 = vrot.lane.b32.xlu0 %v503, 64
    %v506 = vpop.permute.xlu0 %505
    %v508 = vmul.f32 %v491, %v506
    %509 = vset.pattern.permute.xlu0 3
    %510 = vperm.xlu0 %509, %v123
    %v511 = vpop.permute.xlu0 %510
    %v513 = vmul.f32 %v511, %v152
    %v514 = vadd.f32 %v513, %v156
    %515 = vmatpush.msra.mxu0 0.0
    %516 = vmatpush.msra.mxu0 0.0
    %517 = vmatpush.msra.mxu0 0.0
    %518 = vmatpush.msra.mxu0 0.0
    %519 = vmatpush.msra.mxu0 0.0
    %520 = vmatpush.msra.mxu0 0.0
    %521 = vmatpush.msra.mxu0 0.0
    %522 = vmatpush.msra.mxu0 0.0
    %523 = vmatpush.msra.mxu0 0.0
    %524 = vmatpush.msra.mxu0 0.0
    %525 = vmatpush.msra.mxu0 0.0
    %526 = vmatpush.msra.mxu0 0.0
    %527 = vmatpush.msra.mxu0 %v129
    %528 = vmatpush.msra.mxu0 %v128
    %529 = vmatpush.msra.mxu0 %v127
    %530 = vmatpush.msra.mxu0 %v126
    %531 = vmatmul.f32.gmra.mxu0 %v466
    %v532 = vpop.f32.mrf.mxu0
    %v533 = vadd.f32 0.0, %v532
    %534 = vdwg.mxu0
    %v535 = vadd.f32 %v514, %v533
    %v536 = vtanh.pop %v535
    %v537 = vmul.f32 %v536, %v144
    %v538 = vadd.f32 %v537, %v145
    %v539 = vmul.f32 %v538, %v431
    %541 = vrot.lane.b32.xlu0 %v538, 64
    %v542 = vpop.permute.xlu0 %541
    %v544 = vmul.f32 %v538, %v542
    %546 = vrot.lane.b32.xlu0 %v544, 32
    %v547 = vpop.permute.xlu0 %546
    %v549 = vadd.f32 %v539, %v547
    %v550 = vtanh.pop %v549
    %552 = vrot.lane.b32.xlu0 %v550, 64
    %v553 = vpop.permute.xlu0 %552
    %v555 = vmul.f32 %v538, %v553
    %557 = vrot.lane.b32.xlu0 %v508, 32
    %v558 = vpop.permute.xlu0 %557
    %v559 = vsel %vm159, %v558, 0
    %561 = vmatpush.msra.mxu0 0.0
    %562 = vmatpush.msra.mxu0 0.0
    %563 = vmatpush.msra.mxu0 0.0
    %564 = vmatpush.msra.mxu0 0.0
    %565 = vmatpush.msra.mxu0 0.0
    %566 = vmatpush.msra.mxu0 0.0
    %567 = vmatpush.msra.mxu0 0.0
    %568 = vmatpush.msra.mxu0 0.0
    %569 = vmatpush.msra.mxu0 0.0
    %570 = vmatpush.msra.mxu0 0.0
    %571 = vmatpush.msra.mxu0 0.0
    %572 = vmatpush.msra.mxu0 0.0
    %573 = vmatpush.msra.mxu0 %v137
    %574 = vmatpush.msra.mxu0 %v136
    %575 = vmatpush.msra.mxu0 %v135
    %576 = vmatpush.msra.mxu0 %v134
    %577 = vmatmul.f32.gmra.mxu0 %v559
    %v578 = vpop.f32.mrf.mxu0
    %v579 = vadd.f32 %v205, %v578
    %580 = vdwg.mxu0
    %582 = vrot.lane.b32.xlu0 %v555, 32
    %v583 = vpop.permute.xlu0 %582
    %v584 = vsel %vm159, %v583, 0
    %586 = vmatpush.msra.mxu0 0.0
    %587 = vmatpush.msra.mxu0 0.0
    %588 = vmatpush.msra.mxu0 0.0
    %589 = vmatpush.msra.mxu0 0.0
    %590 = vmatpush.msra.mxu0 0.0
    %591 = vmatpush.msra.mxu0 0.0
    %592 = vmatpush.msra.mxu0 0.0
    %593 = vmatpush.msra.mxu0 0.0
    %594 = vmatpush.msra.mxu0 0.0
    %595 = vmatpush.msra.mxu0 0.0
    %596 = vmatpush.msra.mxu0 0.0
    %597 = vmatpush.msra.mxu0 0.0
    %598 = vmatpush.msra.mxu0 %v133
    %599 = vmatpush.msra.mxu0 %v132
    %600 = vmatpush.msra.mxu0 %v131
    %601 = vmatpush.msra.mxu0 %v130
    %602 = vmatmul.f32.gmra.mxu0 %v584
    %v603 = vpop.f32.mrf.mxu0
    %v604 = vadd.f32 0.0, %v603
    %605 = vdwg.mxu0
    %v606 = vadd.f32 %v579, %v604
    %v607 = vtanh.pop %v606
    %v608 = vmul.f32 %v607, %v144
    %v609 = vadd.f32 %v608, %v145
    %v610 = vmul.f32 %v609, %v502
    %612 = vrot.lane.b32.xlu0 %v609, 64
    %v613 = vpop.permute.xlu0 %612
    %v615 = vmul.f32 %v609, %v613
    %617 = vrot.lane.b32.xlu0 %v615, 32
    %v618 = vpop.permute.xlu0 %617
    %v620 = vadd.f32 %v610, %v618
    %v621 = vtanh.pop %v620
    %623 = vrot.lane.b32.xlu0 %v621, 64
    %v624 = vpop.permute.xlu0 %623
    %v626 = vmul.f32 %v609, %v624
    %627 = vset.pattern.permute.xlu0 4
    %628 = vperm.xlu0 %627, %v123
    %v629 = vpop.permute.xlu0 %628
    %v631 = vmul.f32 %v629, %v152
    %v632 = vadd.f32 %v631, %v156
    %633 = vmatpush.msra.mxu0 0.0
    %634 = vmatpush.msra.mxu0 0.0
    %635 = vmatpush.msra.mxu0 0.0
    %636 = vmatpush.msra.mxu0 0.0
    %637 = vmatpush.msra.mxu0 0.0
    %638 = vmatpush.msra.mxu0 0.0
    %639 = vmatpush.msra.mxu0 0.0
    %640 = vmatpush.msra.mxu0 0.0
    %641 = vmatpush.msra.mxu0 0.0
    %642 = vmatpush.msra.mxu0 0.0
    %643 = vmatpush.msra.mxu0 0.0
    %644 = vmatpush.msra.mxu0 0.0
    %645 = vmatpush.msra.mxu0 %v129
    %646 = vmatpush.msra.mxu0 %v128
    %647 = vmatpush.msra.mxu0 %v127
    %648 = vmatpush.msra.mxu0 %v126
    %649 = vmatmul.f32.gmra.mxu0 %v584
    %v650 = vpop.f32.mrf.mxu0
    %v651 = vadd.f32 0.0, %v650
    %652 = vdwg.mxu0
    %v653 = vadd.f32 %v632, %v651
    %v654 = vtanh.pop %v653
    %v655 = vmul.f32 %v654, %v144
    %v656 = vadd.f32 %v655, %v145
    %v657 = vmul.f32 %v656, %v549
    %659 = vrot.lane.b32.xlu0 %v656, 64
    %v660 = vpop.permute.xlu0 %659
    %v662 = vmul.f32 %v656, %v660
    %664 = vrot.lane.b32.xlu0 %v662, 32
    %v665 = vpop.permute.xlu0 %664
    %v667 = vadd.f32 %v657, %v665
    %v668 = vtanh.pop %v667
    %670 = vrot.lane.b32.xlu0 %v668, 64
    %v671 = vpop.permute.xlu0 %670
    %v673 = vmul.f32 %v656, %v671
    %675 = vrot.lane.b32.xlu0 %v626, 32
    %v676 = vpop.permute.xlu0 %675
    %v677 = vsel %vm159, %v676, 0
    %679 = vmatpush.msra.mxu0 0.0
    %680 = vmatpush.msra.mxu0 0.0
    %681 = vmatpush.msra.mxu0 0.0
    %682 = vmatpush.msra.mxu0 0.0
    %683 = vmatpush.msra.mxu0 0.0
    %684 = vmatpush.msra.mxu0 0.0
    %685 = vmatpush.msra.mxu0 0.0
    %686 = vmatpush.msra.mxu0 0.0
    %687 = vmatpush.msra.mxu0 0.0
    %688 = vmatpush.msra.mxu0 0.0
    %689 = vmatpush.msra.mxu0 0.0
    %690 = vmatpush.msra.mxu0 0.0
    %691 = vmatpush.msra.mxu0 %v137
    %692 = vmatpush.msra.mxu0 %v136
    %693 = vmatpush.msra.mxu0 %v135
    %694 = vmatpush.msra.mxu0 %v134
    %695 = vmatmul.f32.gmra.mxu0 %v677
    %v696 = vpop.f32.mrf.mxu0
    %v697 = vadd.f32 %v205, %v696
    %698 = vdwg.mxu0
    %700 = vrot.lane.b32.xlu0 %v673, 32
    %v701 = vpop.permute.xlu0 %700
    %v702 = vsel %vm159, %v701, 0
    %704 = vmatpush.msra.mxu0 0.0
    %705 = vmatpush.msra.mxu0 0.0
    %706 = vmatpush.msra.mxu0 0.0
    %707 = vmatpush.msra.mxu0 0.0
    %708 = vmatpush.msra.mxu0 0.0
    %709 = vmatpush.msra.mxu0 0.0
    %710 = vmatpush.msra.mxu0 0.0
    %711 = vmatpush.msra.mxu0 0.0
    %712 = vmatpush.msra.mxu0 0.0
    %713 = vmatpush.msra.mxu0 0.0
    %714 = vmatpush.msra.mxu0 0.0
    %715 = vmatpush.msra.mxu0 0.0
    %716 = vmatpush.msra.mxu0 %v133
    %717 = vmatpush.msra.mxu0 %v132
    %718 = vmatpush.msra.mxu0 %v131
    %719 = vmatpush.msra.mxu0 %v130
    %720 = vmatmul.f32.gmra.mxu0 %v702
    %v721 = vpop.f32.mrf.mxu0
    %v722 = vadd.f32 0.0, %v721
    %723 = vdwg.mxu0
    %v724 = vadd.f32 %v697, %v722
    %v725 = vtanh.pop %v724
    %v726 = vmul.f32 %v725, %v144
    %v727 = vadd.f32 %v726, %v145
    %v728 = vmul.f32 %v727, %v620
    %730 = vrot.lane.b32.xlu0 %v727, 64
    %v731 = vpop.permute.xlu0 %730
    %v733 = vmul.f32 %v727, %v731
    %735 = vrot.lane.b32.xlu0 %v733, 32
    %v736 = vpop.permute.xlu0 %735
    %v738 = vadd.f32 %v728, %v736
    %v739 = vtanh.pop %v738
    %741 = vrot.lane.b32.xlu0 %v739, 64
    %v742 = vpop.permute.xlu0 %741
    %v744 = vmul.f32 %v727, %v742
    %745 = vset.pattern.permute.xlu0 5
    %746 = vperm.xlu0 %745, %v123
    %v747 = vpop.permute.xlu0 %746
    %v749 = vmul.f32 %v747, %v152
    %v750 = vadd.f32 %v749, %v156
    %751 = vmatpush.msra.mxu0 0.0
    %752 = vmatpush.msra.mxu0 0.0
    %753 = vmatpush.msra.mxu0 0.0
    %754 = vmatpush.msra.mxu0 0.0
    %755 = vmatpush.msra.mxu0 0.0
    %756 = vmatpush.msra.mxu0 0.0
    %757 = vmatpush.msra.mxu0 0.0
    %758 = vmatpush.msra.mxu0 0.0
    %759 = vmatpush.msra.mxu0 0.0
    %760 = vmatpush.msra.mxu0 0.0
    %761 = vmatpush.msra.mxu0 0.0
    %762 = vmatpush.msra.mxu0 0.0
    %763 = vmatpush.msra.mxu0 %v129
    %764 = vmatpush.msra.mxu0 %v128
    %765 = vmatpush.msra.mxu0 %v127
    %766 = vmatpush.msra.mxu0 %v126
    %767 = vmatmul.f32.gmra.mxu0 %v702
    %v768 = vpop.f32.mrf.mxu0
    %v769 = vadd.f32 0.0, %v768
    %770 = vdwg.mxu0
    %v771 = vadd.f32 %v750, %v769
    %v772 = vtanh.pop %v771
    %v773 = vmul.f32 %v772, %v144
    %v774 = vadd.f32 %v773, %v145
    %v775 = vmul.f32 %v774, %v667
    %777 = vrot.lane.b32.xlu0 %v774, 64
    %v778 = vpop.permute.xlu0 %777
    %v780 = vmul.f32 %v774, %v778
    %782 = vrot.lane.b32.xlu0 %v780, 32
    %v783 = vpop.permute.xlu0 %782
    %v785 = vadd.f32 %v775, %v783
    %v786 = vtanh.pop %v785
    %788 = vrot.lane.b32.xlu0 %v786, 64
    %v789 = vpop.permute.xlu0 %788
    %v791 = vmul.f32 %v774, %v789
    %793 = vrot.lane.b32.xlu0 %v744, 32
    %v794 = vpop.permute.xlu0 %793
    %v795 = vsel %vm159, %v794, 0
    %797 = vmatpush.msra.mxu0 0.0
    %798 = vmatpush.msra.mxu0 0.0
    %799 = vmatpush.msra.mxu0 0.0
    %800 = vmatpush.msra.mxu0 0.0
    %801 = vmatpush.msra.mxu0 0.0
    %802 = vmatpush.msra.mxu0 0.0
    %803 = vmatpush.msra.mxu0 0.0
    %804 = vmatpush.msra.mxu0 0.0
    %805 = vmatpush.msra.mxu0 0.0
    %806 = vmatpush.msra.mxu0 0.0
    %807 = vmatpush.msra.mxu0 0.0
    %808 = vmatpush.msra.mxu0 0.0
    %809 = vmatpush.msra.mxu0 %v137
    %810 = vmatpush.msra.mxu0 %v136
    %811 = vmatpush.msra.mxu0 %v135
    %812 = vmatpush.msra.mxu0 %v134
    %813 = vmatmul.f32.gmra.mxu0 %v795
    %v814 = vpop.f32.mrf.mxu0
    %v815 = vadd.f32 %v205, %v814
    %816 = vdwg.mxu0
    %818 = vrot.lane.b32.xlu0 %v791, 32
    %v819 = vpop.permute.xlu0 %818
    %v820 = vsel %vm159, %v819, 0
    %822 = vmatpush.msra.mxu0 0.0
    %823 = vmatpush.msra.mxu0 0.0
    %824 = vmatpush.msra.mxu0 0.0
    %825 = vmatpush.msra.mxu0 0.0
    %826 = vmatpush.msra.mxu0 0.0
    %827 = vmatpush.msra.mxu0 0.0
    %828 = vmatpush.msra.mxu0 0.0
    %829 = vmatpush.msra.mxu0 0.0
    %830 = vmatpush.msra.mxu0 0.0
    %831 = vmatpush.msra.mxu0 0.0
    %832 = vmatpush.msra.mxu0 0.0
    %833 = vmatpush.msra.mxu0 0.0
    %834 = vmatpush.msra.mxu0 %v133
    %835 = vmatpush.msra.mxu0 %v132
    %836 = vmatpush.msra.mxu0 %v131
    %837 = vmatpush.msra.mxu0 %v130
    %838 = vmatmul.f32.gmra.mxu0 %v820
    %v839 = vpop.f32.mrf.mxu0
    %v840 = vadd.f32 0.0, %v839
    %841 = vdwg.mxu0
    %v842 = vadd.f32 %v815, %v840
    %v843 = vtanh.pop %v842
    %v844 = vmul.f32 %v843, %v144
    %v845 = vadd.f32 %v844, %v145
    %v846 = vmul.f32 %v845, %v738
    %848 = vrot.lane.b32.xlu0 %v845, 64
    %v849 = vpop.permute.xlu0 %848
    %v851 = vmul.f32 %v845, %v849
    %853 = vrot.lane.b32.xlu0 %v851, 32
    %v854 = vpop.permute.xlu0 %853
    %v856 = vadd.f32 %v846, %v854
    %v857 = vtanh.pop %v856
    %859 = vrot.lane.b32.xlu0 %v857, 64
    %v860 = vpop.permute.xlu0 %859
    %v862 = vmul.f32 %v845, %v860
    %863 = vset.pattern.permute.xlu0 6
    %864 = vperm.xlu0 %863, %v123
    %v865 = vpop.permute.xlu0 %864
    %v867 = vmul.f32 %v865, %v152
    %v868 = vadd.f32 %v867, %v156
    %869 = vmatpush.msra.mxu0 0.0
    %870 = vmatpush.msra.mxu0 0.0
    %871 = vmatpush.msra.mxu0 0.0
    %872 = vmatpush.msra.mxu0 0.0
    %873 = vmatpush.msra.mxu0 0.0
    %874 = vmatpush.msra.mxu0 0.0
    %875 = vmatpush.msra.mxu0 0.0
    %876 = vmatpush.msra.mxu0 0.0
    %877 = vmatpush.msra.mxu0 0.0
    %878 = vmatpush.msra.mxu0 0.0
    %879 = vmatpush.msra.mxu0 0.0
    %880 = vmatpush.msra.mxu0 0.0
    %881 = vmatpush.msra.mxu0 %v129
    %882 = vmatpush.msra.mxu0 %v128
    %883 = vmatpush.msra.mxu0 %v127
    %884 = vmatpush.msra.mxu0 %v126
    %885 = vmatmul.f32.gmra.mxu0 %v820
    %v886 = vpop.f32.mrf.mxu0
    %v887 = vadd.f32 0.0, %v886
    %888 = vdwg.mxu0
    %v889 = vadd.f32 %v868, %v887
    %v890 = vtanh.pop %v889
    %v891 = vmul.f32 %v890, %v144
    %v892 = vadd.f32 %v891, %v145
    %v893 = vmul.f32 %v892, %v785
    %895 = vrot.lane.b32.xlu0 %v892, 64
    %v896 = vpop.permute.xlu0 %895
    %v898 = vmul.f32 %v892, %v896
    %900 = vrot.lane.b32.xlu0 %v898, 32
    %v901 = vpop.permute.xlu0 %900
    %v903 = vadd.f32 %v893, %v901
    %v904 = vtanh.pop %v903
    %906 = vrot.lane.b32.xlu0 %v904, 64
    %v907 = vpop.permute.xlu0 %906
    %v909 = vmul.f32 %v892, %v907
    %911 = vrot.lane.b32.xlu0 %v862, 32
    %v912 = vpop.permute.xlu0 %911
    %v913 = vsel %vm159, %v912, 0
    %915 = vmatpush.msra.mxu0 0.0
    %916 = vmatpush.msra.mxu0 0.0
    %917 = vmatpush.msra.mxu0 0.0
    %918 = vmatpush.msra.mxu0 0.0
    %919 = vmatpush.msra.mxu0 0.0
    %920 = vmatpush.msra.mxu0 0.0
    %921 = vmatpush.msra.mxu0 0.0
    %922 = vmatpush.msra.mxu0 0.0
    %923 = vmatpush.msra.mxu0 0.0
    %924 = vmatpush.msra.mxu0 0.0
    %925 = vmatpush.msra.mxu0 0.0
    %926 = vmatpush.msra.mxu0 0.0
    %927 = vmatpush.msra.mxu0 %v137
    %928 = vmatpush.msra.mxu0 %v136
    %929 = vmatpush.msra.mxu0 %v135
    %930 = vmatpush.msra.mxu0 %v134
    %931 = vmatmul.f32.gmra.mxu0 %v913
    %v932 = vpop.f32.mrf.mxu0
    %v933 = vadd.f32 %v205, %v932
    %934 = vdwg.mxu0
    %936 = vrot.lane.b32.xlu0 %v909, 32
    %v937 = vpop.permute.xlu0 %936
    %v938 = vsel %vm159, %v937, 0
    %940 = vmatpush.msra.mxu0 0.0
    %941 = vmatpush.msra.mxu0 0.0
    %942 = vmatpush.msra.mxu0 0.0
    %943 = vmatpush.msra.mxu0 0.0
    %944 = vmatpush.msra.mxu0 0.0
    %945 = vmatpush.msra.mxu0 0.0
    %946 = vmatpush.msra.mxu0 0.0
    %947 = vmatpush.msra.mxu0 0.0
    %948 = vmatpush.msra.mxu0 0.0
    %949 = vmatpush.msra.mxu0 0.0
    %950 = vmatpush.msra.mxu0 0.0
    %951 = vmatpush.msra.mxu0 0.0
    %952 = vmatpush.msra.mxu0 %v133
    %953 = vmatpush.msra.mxu0 %v132
    %954 = vmatpush.msra.mxu0 %v131
    %955 = vmatpush.msra.mxu0 %v130
    %956 = vmatmul.f32.gmra.mxu0 %v938
    %v957 = vpop.f32.mrf.mxu0
    %v958 = vadd.f32 0.0, %v957
    %959 = vdwg.mxu0
    %v960 = vadd.f32 %v933, %v958
    %v961 = vtanh.pop %v960
    %v962 = vmul.f32 %v961, %v144
    %v963 = vadd.f32 %v962, %v145
    %v964 = vmul.f32 %v963, %v856
    %966 = vrot.lane.b32.xlu0 %v963, 64
    %v967 = vpop.permute.xlu0 %966
    %v969 = vmul.f32 %v963, %v967
    %971 = vrot.lane.b32.xlu0 %v969, 32
    %v972 = vpop.permute.xlu0 %971
    %v974 = vadd.f32 %v964, %v972
    %v975 = vtanh.pop %v974
    %977 = vrot.lane.b32.xlu0 %v975, 64
    %v978 = vpop.permute.xlu0 %977
    %v980 = vmul.f32 %v963, %v978
    %981 = vset.pattern.permute.xlu0 7
    %982 = vperm.xlu0 %981, %v123
    %v983 = vpop.permute.xlu0 %982
    %v985 = vmul.f32 %v983, %v152
    %v986 = vadd.f32 %v985, %v156
    %987 = vmatpush.msra.mxu0 0.0
    %988 = vmatpush.msra.mxu0 0.0
    %989 = vmatpush.msra.mxu0 0.0
    %990 = vmatpush.msra.mxu0 0.0
    %991 = vmatpush.msra.mxu0 0.0
    %992 = vmatpush.msra.mxu0 0.0
    %993 = vmatpush.msra.mxu0 0.0
    %994 = vmatpush.msra.mxu0 0.0
    %995 = vmatpush.msra.mxu0 0.0
    %996 = vmatpush.msra.mxu0 0.0
    %997 = vmatpush.msra.mxu0 0.0
    %998 = vmatpush.msra.mxu0 0.0
    %999 = vmatpush.msra.mxu0 %v129
    %1000 = vmatpush.msra.mxu0 %v128
    %1001 = vmatpush.msra.mxu0 %v127
    %1002 = vmatpush.msra.mxu0 %v126
    %1003 = vmatmul.f32.gmra.mxu0 %v938
    %v1004 = vpop.f32.mrf.mxu0
    %v1005 = vadd.f32 0.0, %v1004
    %1006 = vdwg.mxu0
    %v1007 = vadd.f32 %v986, %v1005
    %v1008 = vtanh.pop %v1007
    %v1009 = vmul.f32 %v1008, %v144
    %v1010 = vadd.f32 %v1009, %v145
    %v1011 = vmul.f32 %v1010, %v903
    %1013 = vrot.lane.b32.xlu0 %v1010, 64
    %v1014 = vpop.permute.xlu0 %1013
    %v1016 = vmul.f32 %v1010, %v1014
    %1018 = vrot.lane.b32.xlu0 %v1016, 32
    %v1019 = vpop.permute.xlu0 %1018
    %v1021 = vadd.f32 %v1011, %v1019
    %v1022 = vtanh.pop %v1021
    %1024 = vrot.lane.b32.xlu0 %v1022, 64
    %v1025 = vpop.permute.xlu0 %1024
    %v1027 = vmul.f32 %v1010, %v1025
    %1029 = vrot.lane.b32.xlu0 %v980, 32
    %v1030 = vpop.permute.xlu0 %1029
    %v1031 = vsel %vm159, %v1030, 0
    %1033 = vmatpush.msra.mxu0 0.0
    %1034 = vmatpush.msra.mxu0 0.0
    %1035 = vmatpush.msra.mxu0 0.0
    %1036 = vmatpush.msra.mxu0 0.0
    %1037 = vmatpush.msra.mxu0 0.0
    %1038 = vmatpush.msra.mxu0 0.0
    %1039 = vmatpush.msra.mxu0 0.0
    %1040 = vmatpush.msra.mxu0 0.0
    %1041 = vmatpush.msra.mxu0 0.0
    %1042 = vmatpush.msra.mxu0 0.0
    %1043 = vmatpush.msra.mxu0 0.0
    %1044 = vmatpush.msra.mxu0 0.0
    %1045 = vmatpush.msra.mxu0 %v137
    %1046 = vmatpush.msra.mxu0 %v136
    %1047 = vmatpush.msra.mxu0 %v135
    %1048 = vmatpush.msra.mxu0 %v134
    %1049 = vmatmul.f32.gmra.mxu0 %v1031
    %v1050 = vpop.f32.mrf.mxu0
    %v1051 = vadd.f32 %v205, %v1050
    %1052 = vdwg.mxu0
    %1054 = vrot.lane.b32.xlu0 %v1027, 32
    %v1055 = vpop.permute.xlu0 %1054
    %v1056 = vsel %vm159, %v1055, 0
    %1058 = vmatpush.msra.mxu0 0.0
    %1059 = vmatpush.msra.mxu0 0.0
    %1060 = vmatpush.msra.mxu0 0.0
    %1061 = vmatpush.msra.mxu0 0.0
    %1062 = vmatpush.msra.mxu0 0.0
    %1063 = vmatpush.msra.mxu0 0.0
    %1064 = vmatpush.msra.mxu0 0.0
    %1065 = vmatpush.msra.mxu0 0.0
    %1066 = vmatpush.msra.mxu0 0.0
    %1067 = vmatpush.msra.mxu0 0.0
    %1068 = vmatpush.msra.mxu0 0.0
    %1069 = vmatpush.msra.mxu0 0.0
    %1070 = vmatpush.msra.mxu0 %v133
    %1071 = vmatpush.msra.mxu0 %v132
    %1072 = vmatpush.msra.mxu0 %v131
    %1073 = vmatpush.msra.mxu0 %v130
    %1074 = vmatmul.f32.gmra.mxu0 %v1056
    %v1075 = vpop.f32.mrf.mxu0
    %v1076 = vadd.f32 0.0, %v1075
    %1077 = vdwg.mxu0
    %v1078 = vadd.f32 %v1051, %v1076
    %v1079 = vtanh.pop %v1078
    %v1080 = vmul.f32 %v1079, %v144
    %v1081 = vadd.f32 %v1080, %v145
    %v1082 = vmul.f32 %v1081, %v974
    %1084 = vrot.lane.b32.xlu0 %v1081, 64
    %v1085 = vpop.permute.xlu0 %1084
    %v1087 = vmul.f32 %v1081, %v1085
    %1089 = vrot.lane.b32.xlu0 %v1087, 32
    %v1090 = vpop.permute.xlu0 %1089
    %v1092 = vadd.f32 %v1082, %v1090
    %v1093 = vtanh.pop %v1092
    %1095 = vrot.lane.b32.xlu0 %v1093, 64
    %v1096 = vpop.permute.xlu0 %1095
    %v1098 = vmul.f32 %v1081, %v1096
    %v1099 = vld [vmem:[#allocation11] sm:$0xff]
    %v1100 = vld [vmem:[#allocation11 + $0x8] sm:$0xff]
    %v1101 = vld [vmem:[#allocation11 + $0x10] sm:$0xff]
    %v1102 = vld [vmem:[#allocation11 + $0x18] sm:$0xff]
    %v1103 = vld [vmem:[%s8] sm:$0x1]
    %v1105 = vperm.slane %v1103, 0
    %1108 = vrot.lane.b32.xlu0 %v1098, 32
    %v1109 = vpop.permute.xlu0 %1108
    %v1110 = vsel %vm159, %v1109, 0
    %1112 = vmatpush.msra.mxu0 0.0
    %1113 = vmatpush.msra.mxu0 0.0
    %1114 = vmatpush.msra.mxu0 0.0
    %1115 = vmatpush.msra.mxu0 0.0
    %1116 = vmatpush.msra.mxu0 0.0
    %1117 = vmatpush.msra.mxu0 0.0
    %1118 = vmatpush.msra.mxu0 0.0
    %1119 = vmatpush.msra.mxu0 0.0
    %1120 = vmatpush.msra.mxu0 0.0
    %1121 = vmatpush.msra.mxu0 0.0
    %1122 = vmatpush.msra.mxu0 0.0
    %1123 = vmatpush.msra.mxu0 0.0
    %1124 = vmatpush.msra.mxu0 %v1102
    %1125 = vmatpush.msra.mxu0 %v1101
    %1126 = vmatpush.msra.mxu0 %v1100
    %1127 = vmatpush.msra.mxu0 %v1099
    %1128 = vmatmul.f32.gmra.mxu0 %v1110
    %v1129 = vpop.f32.mrf.mxu0
    %v1130 = vadd.f32 %v1105, %v1129
    %1131 = vdwg.mxu0
    %1132 = vst [vmem:[#allocation13] sm:$0xf] %v1130
    // Predicated region
    $region62: #{tpu_custom_call.1} parent=1 // pred_check
      _
    $region63: #{tpu_custom_call.1} parent=1 // pred_check_branch
      %1134 = sbr.rel (0) target = $region65
    $region64: #{tpu_custom_call.1} parent=1 // pred_region
      %1136 = vsyncadd [#allocation4], 0
      %s1138 = sshll.u32 [#allocation13], 4
      %s1139 = int_to_ptr.vmem [resolvable:$true] %s1138
      %s1140 = sshll.u32 %s9, 4
      %s1141 = int_to_ptr.hbm [resolvable:$true] %s1140
      %1143 = dma.vmem_to_hbm [thread:$0]  %s1139, 64, %s1141, [#allocation4]
    $region65: #{tpu_custom_call.1} parent=1 // pred_fallthru
      _
    // Predicated region
    $region66: #{tpu_custom_call.1} parent=1 // pred_check
      _
    $region67: #{tpu_custom_call.1} parent=1 // pred_check_branch
      %1145 = sbr.rel (0) target = $region69
    $region68: #{tpu_custom_call.1} parent=1 // pred_region
      %1147 = dma.done [#allocation4], 64
    $region69: #{tpu_custom_call.1} parent=1 // pred_fallthru
      _
    %1148 = vsyncpa [#allocation3], 1
    %1149 = vsyncpa [#allocation6], 1
    %1150 = vsyncpa [#allocation9], 1
    %1151 = vsyncpa [#allocation12], 1
    %1152 = vsyncpa [#allocation4], 1

</llo_original>
